<compile_context>
chip_gen: v7x
topology: tpu7x:2x2x1
jax: 0.10.0
libtpu: 0.0.40
codegen_flags: <defaults>
</compile_context>

<pallas_src>
import jax
import jax.numpy as jnp
from jax.experimental import pallas as pl
from jax.experimental.pallas import tpu as pltpu

# Logical layer sizes (PyTorch MNISTNet) and lane-padded kernel sizes.
D_IN, D_H1, D_H2, D_OUT = 784, 400, 100, 10
P_IN, P_H1, P_H2, P_OUT = 896, 512, 128, 128   # multiples of 128 lanes


def mlp_kernel(x_ref, w1_ref, b1_ref, w2_ref, b2_ref, w3_ref, b3_ref, out_ref):
    # fc1 + relu : bf16 operands, f32 accumulation, f32 elementwise
    h1 = jnp.dot(x_ref[...], w1_ref[...], preferred_element_type=jnp.float32)
    h1 = jnp.maximum(h1 + b1_ref[...], 0.0)
    # fc2 + relu
    h2 = jnp.dot(h1.astype(jnp.bfloat16), w2_ref[...],
                 preferred_element_type=jnp.float32)
    h2 = jnp.maximum(h2 + b2_ref[...], 0.0)
    # fc3 (logits, no activation)
    out = jnp.dot(h2.astype(jnp.bfloat16), w3_ref[...],
                  preferred_element_type=jnp.float32)
    out_ref[...] = (out + b3_ref[...]).astype(out_ref.dtype)


def _pad_to(a, rows, cols, dtype):
    """Zero-pad a 2-D array up to (rows, cols) and cast."""
    out = jnp.zeros((rows, cols), dtype)
    return out.at[: a.shape[0], : a.shape[1]].set(a.astype(dtype))


def mnist_net_forward(x, params):
    """x: (B, 784). params: w{1,2,3} as (in, out) f32, b{1,2,3} as (1, out) f32.
    Returns (B, 10) f32 logits."""
    B = x.shape[0]

    # Batch tile: fill the MXU rows when the batch allows it
    # (128 matches v5e's 4x128x128 MXU, 256 matches v6e/v7x's 2x256x256).
    if B >= 256:
        tb = 256
    elif B >= 128:
        tb = 128
    else:
        tb = max(8, ((B + 7) // 8) * 8)        # small batch: one sublane-aligned tile
    b_pad = ((B + tb - 1) // tb) * tb

    # Zero padding is exact: padded K-columns contribute 0 to the dot products,
    # and padded N-columns have zero weights & biases (ReLU(0)=0), so the extra
    # lanes never perturb the real 10 logits.
    xp = _pad_to(x, b_pad, P_IN, jnp.bfloat16)
    w1 = _pad_to(params["w1"], P_IN, P_H1, jnp.bfloat16)
    w2 = _pad_to(params["w2"], P_H1, P_H2, jnp.bfloat16)
    w3 = _pad_to(params["w3"], P_H2, P_OUT, jnp.bfloat16)
    b1 = _pad_to(params["b1"], 1, P_H1, jnp.float32)
    b2 = _pad_to(params["b2"], 1, P_H2, jnp.float32)
    b3 = _pad_to(params["b3"], 1, P_OUT, jnp.float32)

    # Weights / biases: constant index_map -> VMEM-resident, DMA'd once.
    resident = lambda shape: pl.BlockSpec(shape, lambda i: (0, 0))

    out_padded = pl.pallas_call(
        mlp_kernel,
        out_shape=jax.ShapeDtypeStruct((b_pad, P_OUT), jnp.float32),
        grid=(b_pad // tb,),
        in_specs=[
            pl.BlockSpec((tb, P_IN), lambda i: (i, 0)),   # x: batch-tiled, pipelined
            resident((P_IN, P_H1)), resident((1, P_H1)),
            resident((P_H1, P_H2)), resident((1, P_H2)),
            resident((P_H2, P_OUT)), resident((1, P_OUT)),
        ],
        out_specs=pl.BlockSpec((tb, P_OUT), lambda i: (i, 0)),
        compiler_params=pltpu.CompilerParams(
            dimension_semantics=("parallel",)),
    )(xp, w1, b1, w2, b2, w3, b3)

    return out_padded[:B, :D_OUT]


def init_params(key):
    """PyTorch nn.Linear-style init (U[-1/sqrt(fan_in), +1/sqrt(fan_in)]).
    Weights stored as (in_features, out_features) for the kernel's x @ W convention."""
    dims = [(D_IN, D_H1), (D_H1, D_H2), (D_H2, D_OUT)]
    params = {}
    for i, (fan_in, fan_out) in enumerate(dims, start=1):
        key, kw, kb = jax.random.split(key, 3)
        bound = 1.0 / jnp.sqrt(jnp.float32(fan_in))
        params[f"w{i}"] = jax.random.uniform(
            kw, (fan_in, fan_out), jnp.float32, minval=-bound, maxval=bound)
        params[f"b{i}"] = jax.random.uniform(
            kb, (1, fan_out), jnp.float32, minval=-bound, maxval=bound)
    return params


if __name__ == "__main__":
    key = jax.random.PRNGKey(0)
    pkey, xkey = jax.random.split(key)
    params = init_params(pkey)

    B = 8  # flattened 28x28 MNIST = 784 features
    x = jax.random.normal(xkey, (B, D_IN), jnp.float32)

    fwd = jax.jit(mnist_net_forward)
    out = jax.block_until_ready(fwd(x, params))

    # Plain-JAX f32 reference; tolerance loosened because matmul operands are bf16.
    ref = jnp.maximum(x @ params["w1"] + params["b1"], 0.0)
    ref = jnp.maximum(ref @ params["w2"] + params["b2"], 0.0)
    ref = ref @ params["w3"] + params["b3"]

    assert out.shape == (B, D_OUT)
    assert jnp.allclose(out, ref, atol=3e-2, rtol=3e-2), (
        "max abs err = %f" % float(jnp.max(jnp.abs(out - ref))))

    print("KERNEL_OK")
</pallas_src>

<mosaic_0001>
module attributes {stable_mosaic.version = 11 : i64} {
  func.func @mlp_kernel(%arg0: i32, %arg1: memref<8x896xbf16, #tpu.memory_space<vmem>>, %arg2: memref<896x512xbf16, #tpu.memory_space<vmem>>, %arg3: memref<1x512xf32, #tpu.memory_space<vmem>>, %arg4: memref<512x128xbf16, #tpu.memory_space<vmem>>, %arg5: memref<1x128xf32, #tpu.memory_space<vmem>>, %arg6: memref<128x128xbf16, #tpu.memory_space<vmem>>, %arg7: memref<1x128xf32, #tpu.memory_space<vmem>>, %arg8: memref<8x128xf32, #tpu.memory_space<vmem>>) attributes {dimension_semantics = [#tpu.dimension_semantics<parallel>], iteration_bounds = array<i64: 1>, scalar_prefetch = 0 : i64, scratch_operands = 0 : i64, tpu.core_type = #tpu.core_type<tc>, window_params = [{transform_indices = @transform_0, window_bounds = array<i64: 8, 896>}, {pipeline_mode = #tpu.pipeline_mode<synchronous>, transform_indices = @transform_1, window_bounds = array<i64: 896, 512>}, {pipeline_mode = #tpu.pipeline_mode<synchronous>, transform_indices = @transform_2, window_bounds = array<i64: 1, 512>}, {pipeline_mode = #tpu.pipeline_mode<synchronous>, transform_indices = @transform_3, window_bounds = array<i64: 512, 128>}, {pipeline_mode = #tpu.pipeline_mode<synchronous>, transform_indices = @transform_4, window_bounds = array<i64: 1, 128>}, {pipeline_mode = #tpu.pipeline_mode<synchronous>, transform_indices = @transform_5, window_bounds = array<i64: 128, 128>}, {pipeline_mode = #tpu.pipeline_mode<synchronous>, transform_indices = @transform_6, window_bounds = array<i64: 1, 128>}, {transform_indices = @transform_7, window_bounds = array<i64: 8, 128>}]} {
    %c0 = arith.constant 0 : index
    %c0_0 = arith.constant 0 : index
    %0 = vector.load %arg1[%c0, %c0_0] : memref<8x896xbf16, #tpu.memory_space<vmem>>, vector<8x896xbf16>
    %c0_1 = arith.constant 0 : index
    %c0_2 = arith.constant 0 : index
    %1 = vector.load %arg2[%c0_1, %c0_2] : memref<896x512xbf16, #tpu.memory_space<vmem>>, vector<896x512xbf16>
    %cst = arith.constant dense<0.000000e+00> : vector<8x512xf32>
    %2 = tpu.matmul %0, %1, %cst {dimension_numbers = #tpu.dot_dimension_numbers<[1], [0], [0], [1], [0, 0, 1, 1], [], []>} : vector<8x896xbf16>, vector<896x512xbf16>, vector<8x512xf32> -> vector<8x512xf32>
    %c0_3 = arith.constant 0 : index
    %c0_4 = arith.constant 0 : index
    %3 = vector.load %arg3[%c0_3, %c0_4] : memref<1x512xf32, #tpu.memory_space<vmem>>, vector<1x512xf32>
    %4 = vector.broadcast %3 : vector<1x512xf32> to vector<8x512xf32>
    %5 = arith.addf %2, %4 : vector<8x512xf32>
    %cst_5 = arith.constant 0.000000e+00 : f32
    %6 = vector.broadcast %cst_5 : f32 to vector<8x512xf32>
    %7 = arith.maximumf %5, %6 : vector<8x512xf32>
    %8 = arith.truncf %7 : vector<8x512xf32> to vector<8x512xbf16>
    %c0_6 = arith.constant 0 : index
    %c0_7 = arith.constant 0 : index
    %9 = vector.load %arg4[%c0_6, %c0_7] : memref<512x128xbf16, #tpu.memory_space<vmem>>, vector<512x128xbf16>
    %cst_8 = arith.constant dense<0.000000e+00> : vector<8x128xf32>
    %10 = tpu.matmul %8, %9, %cst_8 {dimension_numbers = #tpu.dot_dimension_numbers<[1], [0], [0], [1], [0, 0, 1, 1], [], []>} : vector<8x512xbf16>, vector<512x128xbf16>, vector<8x128xf32> -> vector<8x128xf32>
    %c0_9 = arith.constant 0 : index
    %c0_10 = arith.constant 0 : index
    %11 = vector.load %arg5[%c0_9, %c0_10] : memref<1x128xf32, #tpu.memory_space<vmem>>, vector<1x128xf32>
    %12 = vector.broadcast %11 : vector<1x128xf32> to vector<8x128xf32>
    %13 = arith.addf %10, %12 : vector<8x128xf32>
    %cst_11 = arith.constant 0.000000e+00 : f32
    %14 = vector.broadcast %cst_11 : f32 to vector<8x128xf32>
    %15 = arith.maximumf %13, %14 : vector<8x128xf32>
    %16 = arith.truncf %15 : vector<8x128xf32> to vector<8x128xbf16>
    %c0_12 = arith.constant 0 : index
    %c0_13 = arith.constant 0 : index
    %17 = vector.load %arg6[%c0_12, %c0_13] : memref<128x128xbf16, #tpu.memory_space<vmem>>, vector<128x128xbf16>
    %cst_14 = arith.constant dense<0.000000e+00> : vector<8x128xf32>
    %18 = tpu.matmul %16, %17, %cst_14 {dimension_numbers = #tpu.dot_dimension_numbers<[1], [0], [0], [1], [0, 0, 1, 1], [], []>} : vector<8x128xbf16>, vector<128x128xbf16>, vector<8x128xf32> -> vector<8x128xf32>
    %c0_15 = arith.constant 0 : index
    %c0_16 = arith.constant 0 : index
    %19 = vector.load %arg7[%c0_15, %c0_16] : memref<1x128xf32, #tpu.memory_space<vmem>>, vector<1x128xf32>
    %20 = vector.broadcast %19 : vector<1x128xf32> to vector<8x128xf32>
    %21 = arith.addf %18, %20 : vector<8x128xf32>
    %c0_17 = arith.constant 0 : index
    %c0_18 = arith.constant 0 : index
    %22 = vector.load %arg8[%c0_17, %c0_18] : memref<8x128xf32, #tpu.memory_space<vmem>>, vector<8x128xf32>
    tpu.vector_store %arg8[%c0_17, %c0_18], %21 {strides = array<i32>} : memref<8x128xf32, #tpu.memory_space<vmem>>, vector<8x128xf32>,
    return
  }
  func.func @transform_0(%arg0: i32) -> (i32, i32) {
    %c0_i32 = arith.constant 0 : i32
    %c0_i32_0 = arith.constant 0 : i32
    return %arg0, %c0_i32 : i32, i32
  }
  func.func @transform_1(%arg0: i32) -> (i32, i32) {
    %c0_i32 = arith.constant 0 : i32
    %c0_i32_0 = arith.constant 0 : i32
    %c0_i32_1 = arith.constant 0 : i32
    return %c0_i32, %c0_i32_0 : i32, i32
  }
  func.func @transform_2(%arg0: i32) -> (i32, i32) {
    %c0_i32 = arith.constant 0 : i32
    %c0_i32_0 = arith.constant 0 : i32
    %c0_i32_1 = arith.constant 0 : i32
    return %c0_i32, %c0_i32_0 : i32, i32
  }
  func.func @transform_3(%arg0: i32) -> (i32, i32) {
    %c0_i32 = arith.constant 0 : i32
    %c0_i32_0 = arith.constant 0 : i32
    %c0_i32_1 = arith.constant 0 : i32
    return %c0_i32, %c0_i32_0 : i32, i32
  }
  func.func @transform_4(%arg0: i32) -> (i32, i32) {
    %c0_i32 = arith.constant 0 : i32
    %c0_i32_0 = arith.constant 0 : i32
    %c0_i32_1 = arith.constant 0 : i32
    return %c0_i32, %c0_i32_0 : i32, i32
  }
  func.func @transform_5(%arg0: i32) -> (i32, i32) {
    %c0_i32 = arith.constant 0 : i32
    %c0_i32_0 = arith.constant 0 : i32
    %c0_i32_1 = arith.constant 0 : i32
    return %c0_i32, %c0_i32_0 : i32, i32
  }
  func.func @transform_6(%arg0: i32) -> (i32, i32) {
    %c0_i32 = arith.constant 0 : i32
    %c0_i32_0 = arith.constant 0 : i32
    %c0_i32_1 = arith.constant 0 : i32
    return %c0_i32, %c0_i32_0 : i32, i32
  }
  func.func @transform_7(%arg0: i32) -> (i32, i32) {
    %c0_i32 = arith.constant 0 : i32
    %c0_i32_0 = arith.constant 0 : i32
    return %arg0, %c0_i32 : i32, i32
  }
}

</mosaic_0001>

<llo_original>
// kernel: mnist_net_forward.1
$region0: #{mnist_net_forward.1}
  #allocation0 [shape = 'u32[]', space=smem, size = 0x4, offset = 0x4, fixed_abs, tag = 'smem constant byte address 0x4 - core index']
  #allocation1 [shape = 'u32[144,128]{1,0:T(1,128)}', space=vmem, size = 0x12000, scoped, tag = 'internal scratch']
  %s0 = inlined_call_operand.vmem [shape: bf16[8,896], index: 0, kind: input, shape index: {}]
  %s1 = inlined_call_operand.vmem [shape: bf16[896,512], index: 1, kind: input, shape index: {}]
  %s2 = inlined_call_operand.vmem [shape: f32[1,512], index: 2, kind: input, shape index: {}]
  %s3 = inlined_call_operand.vmem [shape: bf16[512,128], index: 3, kind: input, shape index: {}]
  %s4 = inlined_call_operand.vmem [shape: f32[1,128], index: 4, kind: input, shape index: {}]
  %s5 = inlined_call_operand.vmem [shape: bf16[128,128], index: 5, kind: input, shape index: {}]
  %s6 = inlined_call_operand.vmem [shape: f32[1,128], index: 6, kind: input, shape index: {}]
  %s7 = inlined_call_operand.hbm [shape: f32[8,128], index: 7, kind: output, shape index: {}]
  %s8 = sld [smem:[#allocation0]]
  $region38: #{mnist_net_forward.1} parent=0
    _
  %s10 = ssub.s32 1, %s8
  %s11 = scalar_select 0, %s10, %s8
  $region1: #{mnist_net_forward.1} parent=0
    #allocation2 [shape = 'u8[4096]{0}', space=vmem, size = 0x1000, scoped, tag = 'output window, operand 0, single buffered']
    #allocation3 [shape = 's32[1]{0}', space=sflag, size = 0x4, scoped, tag = 'scoped memory for mnist_net_forward.1']
    %12 = vsyncpa [#allocation3], 0
    // Predicated region
    $region2: #{mnist_net_forward.1} parent=1 // pred_check
      _
    $region3: #{mnist_net_forward.1} parent=1 // pred_check_branch
      %14 = sbr.rel (0) target = $region5
    $region4: #{mnist_net_forward.1} parent=1 // pred_region
      _
    $region5: #{mnist_net_forward.1} parent=1 // pred_fallthru
      _
    // Predicated region
    $region6: #{mnist_net_forward.1} parent=1 // pred_check
      _
    $region7: #{mnist_net_forward.1} parent=1 // pred_check_branch
      %16 = sbr.rel (0) target = $region9
    $region8: #{mnist_net_forward.1} parent=1 // pred_region
      _
    $region9: #{mnist_net_forward.1} parent=1 // pred_fallthru
      _
    // Predicated region
    $region10: #{mnist_net_forward.1} parent=1 // pred_check
      _
    $region11: #{mnist_net_forward.1} parent=1 // pred_check_branch
      %18 = sbr.rel (0) target = $region13
    $region12: #{mnist_net_forward.1} parent=1 // pred_region
      _
    $region13: #{mnist_net_forward.1} parent=1 // pred_fallthru
      _
    // Predicated region
    $region14: #{mnist_net_forward.1} parent=1 // pred_check
      _
    $region15: #{mnist_net_forward.1} parent=1 // pred_check_branch
      %20 = sbr.rel (0) target = $region17
    $region16: #{mnist_net_forward.1} parent=1 // pred_region
      _
    $region17: #{mnist_net_forward.1} parent=1 // pred_fallthru
      _
    // Predicated region
    $region18: #{mnist_net_forward.1} parent=1 // pred_check
      _
    $region19: #{mnist_net_forward.1} parent=1 // pred_check_branch
      %22 = sbr.rel (0) target = $region21
    $region20: #{mnist_net_forward.1} parent=1 // pred_region
      _
    $region21: #{mnist_net_forward.1} parent=1 // pred_fallthru
      _
    // Predicated region
    $region22: #{mnist_net_forward.1} parent=1 // pred_check
      _
    $region23: #{mnist_net_forward.1} parent=1 // pred_check_branch
      %24 = sbr.rel (0) target = $region25
    $region24: #{mnist_net_forward.1} parent=1 // pred_region
      _
    $region25: #{mnist_net_forward.1} parent=1 // pred_fallthru
      _
    // Predicated region
    $region26: #{mnist_net_forward.1} parent=1 // pred_check
      _
    $region27: #{mnist_net_forward.1} parent=1 // pred_check_branch
      %26 = sbr.rel (0) target = $region29
    $region28: #{mnist_net_forward.1} parent=1 // pred_region
      _
    $region29: #{mnist_net_forward.1} parent=1 // pred_fallthru
      _
    %v28 = vld [vmem:[%s0] sm:$0xff]
    %v29 = vld [vmem:[%s0 + $0x8] sm:$0xff]
    %v30 = vld [vmem:[%s0 + $0x10] sm:$0xff]
    %v31 = vld [vmem:[%s0 + $0x18] sm:$0xf]
    %v32 = vld [vmem:[%s1] sm:$0xff]
    %v33 = vld [vmem:[%s1 + $0x8] sm:$0xff]
    %v34 = vld [vmem:[%s1 + $0x10] sm:$0xff]
    %v35 = vld [vmem:[%s1 + $0x18] sm:$0xff]
    %v36 = vld [vmem:[%s1 + $0x20] sm:$0xff]
    %v37 = vld [vmem:[%s1 + $0x28] sm:$0xff]
    %v38 = vld [vmem:[%s1 + $0x30] sm:$0xff]
    %v39 = vld [vmem:[%s1 + $0x38] sm:$0xff]
    %v40 = vld [vmem:[%s1 + $0x40] sm:$0xff]
    %v41 = vld [vmem:[%s1 + $0x48] sm:$0xff]
    %v42 = vld [vmem:[%s1 + $0x50] sm:$0xff]
    %v43 = vld [vmem:[%s1 + $0x58] sm:$0xff]
    %v44 = vld [vmem:[%s1 + $0x60] sm:$0xff]
    %v45 = vld [vmem:[%s1 + $0x68] sm:$0xff]
    %v46 = vld [vmem:[%s1 + $0x70] sm:$0xff]
    %v47 = vld [vmem:[%s1 + $0x78] sm:$0xff]
    %v48 = vld [vmem:[%s1 + $0x80] sm:$0xff]
    %v49 = vld [vmem:[%s1 + $0x88] sm:$0xff]
    %v50 = vld [vmem:[%s1 + $0x90] sm:$0xff]
    %v51 = vld [vmem:[%s1 + $0x98] sm:$0xff]
    %v52 = vld [vmem:[%s1 + $0xa0] sm:$0xff]
    %v53 = vld [vmem:[%s1 + $0xa8] sm:$0xff]
    %v54 = vld [vmem:[%s1 + $0xb0] sm:$0xff]
    %v55 = vld [vmem:[%s1 + $0xb8] sm:$0xff]
    %v56 = vld [vmem:[%s1 + $0xc0] sm:$0xff]
    %v57 = vld [vmem:[%s1 + $0xc8] sm:$0xff]
    %v58 = vld [vmem:[%s1 + $0xd0] sm:$0xff]
    %v59 = vld [vmem:[%s1 + $0xd8] sm:$0xff]
    %v60 = vld [vmem:[%s1 + $0xe0] sm:$0xff]
    %v61 = vld [vmem:[%s1 + $0xe8] sm:$0xff]
    %v62 = vld [vmem:[%s1 + $0xf0] sm:$0xff]
    %v63 = vld [vmem:[%s1 + $0xf8] sm:$0xff]
    %v64 = vld [vmem:[%s1 + $0x100] sm:$0xff]
    %v65 = vld [vmem:[%s1 + $0x108] sm:$0xff]
    %v66 = vld [vmem:[%s1 + $0x110] sm:$0xff]
    %v67 = vld [vmem:[%s1 + $0x118] sm:$0xff]
    %v68 = vld [vmem:[%s1 + $0x120] sm:$0xff]
    %v69 = vld [vmem:[%s1 + $0x128] sm:$0xff]
    %v70 = vld [vmem:[%s1 + $0x130] sm:$0xff]
    %v71 = vld [vmem:[%s1 + $0x138] sm:$0xff]
    %v72 = vld [vmem:[%s1 + $0x140] sm:$0xff]
    %v73 = vld [vmem:[%s1 + $0x148] sm:$0xff]
    %v74 = vld [vmem:[%s1 + $0x150] sm:$0xff]
    %v75 = vld [vmem:[%s1 + $0x158] sm:$0xff]
    %v76 = vld [vmem:[%s1 + $0x160] sm:$0xff]
    %v77 = vld [vmem:[%s1 + $0x168] sm:$0xff]
    %v78 = vld [vmem:[%s1 + $0x170] sm:$0xff]
    %v79 = vld [vmem:[%s1 + $0x178] sm:$0xff]
    %v80 = vld [vmem:[%s1 + $0x180] sm:$0xff]
    %v81 = vld [vmem:[%s1 + $0x188] sm:$0xff]
    %v82 = vld [vmem:[%s1 + $0x190] sm:$0xff]
    %v83 = vld [vmem:[%s1 + $0x198] sm:$0xff]
    %v84 = vld [vmem:[%s1 + $0x1a0] sm:$0xff]
    %v85 = vld [vmem:[%s1 + $0x1a8] sm:$0xff]
    %v86 = vld [vmem:[%s1 + $0x1b0] sm:$0xff]
    %v87 = vld [vmem:[%s1 + $0x1b8] sm:$0xff]
    %v88 = vld [vmem:[%s1 + $0x1c0] sm:$0xff]
    %v89 = vld [vmem:[%s1 + $0x1c8] sm:$0xff]
    %v90 = vld [vmem:[%s1 + $0x1d0] sm:$0xff]
    %v91 = vld [vmem:[%s1 + $0x1d8] sm:$0xff]
    %v92 = vld [vmem:[%s1 + $0x1e0] sm:$0xff]
    %v93 = vld [vmem:[%s1 + $0x1e8] sm:$0xff]
    %v94 = vld [vmem:[%s1 + $0x1f0] sm:$0xff]
    %v95 = vld [vmem:[%s1 + $0x1f8] sm:$0xff]
    %v96 = vld [vmem:[%s1 + $0x200] sm:$0xff]
    %v97 = vld [vmem:[%s1 + $0x208] sm:$0xff]
    %v98 = vld [vmem:[%s1 + $0x210] sm:$0xff]
    %v99 = vld [vmem:[%s1 + $0x218] sm:$0xff]
    %v100 = vld [vmem:[%s1 + $0x220] sm:$0xff]
    %v101 = vld [vmem:[%s1 + $0x228] sm:$0xff]
    %v102 = vld [vmem:[%s1 + $0x230] sm:$0xff]
    %v103 = vld [vmem:[%s1 + $0x238] sm:$0xff]
    %v104 = vld [vmem:[%s1 + $0x240] sm:$0xff]
    %v105 = vld [vmem:[%s1 + $0x248] sm:$0xff]
    %v106 = vld [vmem:[%s1 + $0x250] sm:$0xff]
    %v107 = vld [vmem:[%s1 + $0x258] sm:$0xff]
    %v108 = vld [vmem:[%s1 + $0x260] sm:$0xff]
    %v109 = vld [vmem:[%s1 + $0x268] sm:$0xff]
    %v110 = vld [vmem:[%s1 + $0x270] sm:$0xff]
    %v111 = vld [vmem:[%s1 + $0x278] sm:$0xff]
    %v112 = vld [vmem:[%s1 + $0x280] sm:$0xff]
    %v113 = vld [vmem:[%s1 + $0x288] sm:$0xff]
    %v114 = vld [vmem:[%s1 + $0x290] sm:$0xff]
    %v115 = vld [vmem:[%s1 + $0x298] sm:$0xff]
    %v116 = vld [vmem:[%s1 + $0x2a0] sm:$0xff]
    %v117 = vld [vmem:[%s1 + $0x2a8] sm:$0xff]
    %v118 = vld [vmem:[%s1 + $0x2b0] sm:$0xff]
    %v119 = vld [vmem:[%s1 + $0x2b8] sm:$0xff]
    %v120 = vld [vmem:[%s1 + $0x2c0] sm:$0xff]
    %v121 = vld [vmem:[%s1 + $0x2c8] sm:$0xff]
    %v122 = vld [vmem:[%s1 + $0x2d0] sm:$0xff]
    %v123 = vld [vmem:[%s1 + $0x2d8] sm:$0xff]
    %v124 = vld [vmem:[%s1 + $0x2e0] sm:$0xff]
    %v125 = vld [vmem:[%s1 + $0x2e8] sm:$0xff]
    %v126 = vld [vmem:[%s1 + $0x2f0] sm:$0xff]
    %v127 = vld [vmem:[%s1 + $0x2f8] sm:$0xff]
    %v128 = vld [vmem:[%s1 + $0x300] sm:$0xff]
    %v129 = vld [vmem:[%s1 + $0x308] sm:$0xff]
    %v130 = vld [vmem:[%s1 + $0x310] sm:$0xff]
    %v131 = vld [vmem:[%s1 + $0x318] sm:$0xff]
    %v132 = vld [vmem:[%s1 + $0x320] sm:$0xff]
    %v133 = vld [vmem:[%s1 + $0x328] sm:$0xff]
    %v134 = vld [vmem:[%s1 + $0x330] sm:$0xff]
    %v135 = vld [vmem:[%s1 + $0x338] sm:$0xff]
    %v136 = vld [vmem:[%s1 + $0x340] sm:$0xff]
    %v137 = vld [vmem:[%s1 + $0x348] sm:$0xff]
    %v138 = vld [vmem:[%s1 + $0x350] sm:$0xff]
    %v139 = vld [vmem:[%s1 + $0x358] sm:$0xff]
    %v140 = vld [vmem:[%s1 + $0x360] sm:$0xff]
    %v141 = vld [vmem:[%s1 + $0x368] sm:$0xff]
    %v142 = vld [vmem:[%s1 + $0x370] sm:$0xff]
    %v143 = vld [vmem:[%s1 + $0x378] sm:$0xff]
    %v144 = vld [vmem:[%s1 + $0x380] sm:$0xff]
    %v145 = vld [vmem:[%s1 + $0x388] sm:$0xff]
    %v146 = vld [vmem:[%s1 + $0x390] sm:$0xff]
    %v147 = vld [vmem:[%s1 + $0x398] sm:$0xff]
    %v148 = vld [vmem:[%s1 + $0x3a0] sm:$0xff]
    %v149 = vld [vmem:[%s1 + $0x3a8] sm:$0xff]
    %v150 = vld [vmem:[%s1 + $0x3b0] sm:$0xff]
    %v151 = vld [vmem:[%s1 + $0x3b8] sm:$0xff]
    %v152 = vld [vmem:[%s1 + $0x3c0] sm:$0xff]
    %v153 = vld [vmem:[%s1 + $0x3c8] sm:$0xff]
    %v154 = vld [vmem:[%s1 + $0x3d0] sm:$0xff]
    %v155 = vld [vmem:[%s1 + $0x3d8] sm:$0xff]
    %v156 = vld [vmem:[%s1 + $0x3e0] sm:$0xff]
    %v157 = vld [vmem:[%s1 + $0x3e8] sm:$0xff]
    %v158 = vld [vmem:[%s1 + $0x3f0] sm:$0xff]
    %v159 = vld [vmem:[%s1 + $0x3f8] sm:$0xff]
    %v160 = vld [vmem:[%s1 + $0x400] sm:$0xff]
    %v161 = vld [vmem:[%s1 + $0x408] sm:$0xff]
    %v162 = vld [vmem:[%s1 + $0x410] sm:$0xff]
    %v163 = vld [vmem:[%s1 + $0x418] sm:$0xff]
    %v164 = vld [vmem:[%s1 + $0x420] sm:$0xff]
    %v165 = vld [vmem:[%s1 + $0x428] sm:$0xff]
    %v166 = vld [vmem:[%s1 + $0x430] sm:$0xff]
    %v167 = vld [vmem:[%s1 + $0x438] sm:$0xff]
    %v168 = vld [vmem:[%s1 + $0x440] sm:$0xff]
    %v169 = vld [vmem:[%s1 + $0x448] sm:$0xff]
    %v170 = vld [vmem:[%s1 + $0x450] sm:$0xff]
    %v171 = vld [vmem:[%s1 + $0x458] sm:$0xff]
    %v172 = vld [vmem:[%s1 + $0x460] sm:$0xff]
    %v173 = vld [vmem:[%s1 + $0x468] sm:$0xff]
    %v174 = vld [vmem:[%s1 + $0x470] sm:$0xff]
    %v175 = vld [vmem:[%s1 + $0x478] sm:$0xff]
    %v176 = vld [vmem:[%s1 + $0x480] sm:$0xff]
    %v177 = vld [vmem:[%s1 + $0x488] sm:$0xff]
    %v178 = vld [vmem:[%s1 + $0x490] sm:$0xff]
    %v179 = vld [vmem:[%s1 + $0x498] sm:$0xff]
    %v180 = vld [vmem:[%s1 + $0x4a0] sm:$0xff]
    %v181 = vld [vmem:[%s1 + $0x4a8] sm:$0xff]
    %v182 = vld [vmem:[%s1 + $0x4b0] sm:$0xff]
    %v183 = vld [vmem:[%s1 + $0x4b8] sm:$0xff]
    %v184 = vld [vmem:[%s1 + $0x4c0] sm:$0xff]
    %v185 = vld [vmem:[%s1 + $0x4c8] sm:$0xff]
    %v186 = vld [vmem:[%s1 + $0x4d0] sm:$0xff]
    %v187 = vld [vmem:[%s1 + $0x4d8] sm:$0xff]
    %v188 = vld [vmem:[%s1 + $0x4e0] sm:$0xff]
    %v189 = vld [vmem:[%s1 + $0x4e8] sm:$0xff]
    %v190 = vld [vmem:[%s1 + $0x4f0] sm:$0xff]
    %v191 = vld [vmem:[%s1 + $0x4f8] sm:$0xff]
    %v192 = vld [vmem:[%s1 + $0x500] sm:$0xff]
    %v193 = vld [vmem:[%s1 + $0x508] sm:$0xff]
    %v194 = vld [vmem:[%s1 + $0x510] sm:$0xff]
    %v195 = vld [vmem:[%s1 + $0x518] sm:$0xff]
    %v196 = vld [vmem:[%s1 + $0x520] sm:$0xff]
    %v197 = vld [vmem:[%s1 + $0x528] sm:$0xff]
    %v198 = vld [vmem:[%s1 + $0x530] sm:$0xff]
    %v199 = vld [vmem:[%s1 + $0x538] sm:$0xff]
    %v200 = vld [vmem:[%s1 + $0x540] sm:$0xff]
    %v201 = vld [vmem:[%s1 + $0x548] sm:$0xff]
    %v202 = vld [vmem:[%s1 + $0x550] sm:$0xff]
    %v203 = vld [vmem:[%s1 + $0x558] sm:$0xff]
    %v204 = vld [vmem:[%s1 + $0x560] sm:$0xff]
    %v205 = vld [vmem:[%s1 + $0x568] sm:$0xff]
    %v206 = vld [vmem:[%s1 + $0x570] sm:$0xff]
    %v207 = vld [vmem:[%s1 + $0x578] sm:$0xff]
    %v208 = vld [vmem:[%s1 + $0x580] sm:$0xff]
    %v209 = vld [vmem:[%s1 + $0x588] sm:$0xff]
    %v210 = vld [vmem:[%s1 + $0x590] sm:$0xff]
    %v211 = vld [vmem:[%s1 + $0x598] sm:$0xff]
    %v212 = vld [vmem:[%s1 + $0x5a0] sm:$0xff]
    %v213 = vld [vmem:[%s1 + $0x5a8] sm:$0xff]
    %v214 = vld [vmem:[%s1 + $0x5b0] sm:$0xff]
    %v215 = vld [vmem:[%s1 + $0x5b8] sm:$0xff]
    %v216 = vld [vmem:[%s1 + $0x5c0] sm:$0xff]
    %v217 = vld [vmem:[%s1 + $0x5c8] sm:$0xff]
    %v218 = vld [vmem:[%s1 + $0x5d0] sm:$0xff]
    %v219 = vld [vmem:[%s1 + $0x5d8] sm:$0xff]
    %v220 = vld [vmem:[%s1 + $0x5e0] sm:$0xff]
    %v221 = vld [vmem:[%s1 + $0x5e8] sm:$0xff]
    %v222 = vld [vmem:[%s1 + $0x5f0] sm:$0xff]
    %v223 = vld [vmem:[%s1 + $0x5f8] sm:$0xff]
    %v224 = vld [vmem:[%s1 + $0x600] sm:$0xff]
    %v225 = vld [vmem:[%s1 + $0x608] sm:$0xff]
    %v226 = vld [vmem:[%s1 + $0x610] sm:$0xff]
    %v227 = vld [vmem:[%s1 + $0x618] sm:$0xff]
    %v228 = vld [vmem:[%s1 + $0x620] sm:$0xff]
    %v229 = vld [vmem:[%s1 + $0x628] sm:$0xff]
    %v230 = vld [vmem:[%s1 + $0x630] sm:$0xff]
    %v231 = vld [vmem:[%s1 + $0x638] sm:$0xff]
    %v232 = vld [vmem:[%s1 + $0x640] sm:$0xff]
    %v233 = vld [vmem:[%s1 + $0x648] sm:$0xff]
    %v234 = vld [vmem:[%s1 + $0x650] sm:$0xff]
    %v235 = vld [vmem:[%s1 + $0x658] sm:$0xff]
    %v236 = vld [vmem:[%s1 + $0x660] sm:$0xff]
    %v237 = vld [vmem:[%s1 + $0x668] sm:$0xff]
    %v238 = vld [vmem:[%s1 + $0x670] sm:$0xff]
    %v239 = vld [vmem:[%s1 + $0x678] sm:$0xff]
    %v240 = vld [vmem:[%s1 + $0x680] sm:$0xff]
    %v241 = vld [vmem:[%s1 + $0x688] sm:$0xff]
    %v242 = vld [vmem:[%s1 + $0x690] sm:$0xff]
    %v243 = vld [vmem:[%s1 + $0x698] sm:$0xff]
    %v244 = vld [vmem:[%s1 + $0x6a0] sm:$0xff]
    %v245 = vld [vmem:[%s1 + $0x6a8] sm:$0xff]
    %v246 = vld [vmem:[%s1 + $0x6b0] sm:$0xff]
    %v247 = vld [vmem:[%s1 + $0x6b8] sm:$0xff]
    %v248 = vld [vmem:[%s1 + $0x6c0] sm:$0xff]
    %v249 = vld [vmem:[%s1 + $0x6c8] sm:$0xff]
    %v250 = vld [vmem:[%s1 + $0x6d0] sm:$0xff]
    %v251 = vld [vmem:[%s1 + $0x6d8] sm:$0xff]
    %v252 = vld [vmem:[%s1 + $0x6e0] sm:$0xff]
    %v253 = vld [vmem:[%s1 + $0x6e8] sm:$0xff]
    %v254 = vld [vmem:[%s1 + $0x6f0] sm:$0xff]
    %v255 = vld [vmem:[%s1 + $0x6f8] sm:$0xff]
    %v256 = vld [vmem:[%s2] sm:$0xf]
    %v258 = vlaneseq
    %v259 = vshrl.u32 %v258, 7
    %v260 = vsub.s32 0, %v259
    %v261 = vrot.slane %v256, %v260
    %v262 = vlaneseq
    %v263 = vshrl.u32 %v262, 7
    %v264 = vsub.s32 1, %v263
    %v265 = vrot.slane %v256, %v264
    %v266 = vlaneseq
    %v267 = vshrl.u32 %v266, 7
    %v268 = vsub.s32 2, %v267
    %v269 = vrot.slane %v256, %v268
    %v270 = vlaneseq
    %v271 = vshrl.u32 %v270, 7
    %v272 = vsub.s32 3, %v271
    %v273 = vrot.slane %v256, %v272
    %v282 = vunpack.c.l.b16 %v28
    %v283 = vunpack.c.h.b16 %v28
    %v284 = vunpack.c.l.b16 %v29
    %v285 = vunpack.c.h.b16 %v29
    %v286 = vunpack.c.l.b16 %v30
    %v287 = vunpack.c.h.b16 %v30
    %v288 = vunpack.c.l.b16 %v31
    %v289 = vpack.c.b16 %v282, %v282
    %v290 = vpack.c.b16 %v283, %v283
    %v291 = vpack.c.b16 %v284, %v284
    %v292 = vpack.c.b16 %v285, %v285
    %v293 = vpack.c.b16 %v286, %v286
    %v294 = vpack.c.b16 %v287, %v287
    %v295 = vpack.c.b16 %v288, %v288
    %v527 = vunpack.c.l.b16 %v32
    %v528 = vunpack.c.h.b16 %v32
    %v529 = vunpack.c.l.b16 %v33
    %v530 = vunpack.c.h.b16 %v33
    %v531 = vunpack.c.l.b16 %v34
    %v532 = vunpack.c.h.b16 %v34
    %v533 = vunpack.c.l.b16 %v35
    %v534 = vunpack.c.h.b16 %v35
    %v535 = vunpack.c.l.b16 %v36
    %v536 = vunpack.c.h.b16 %v36
    %v537 = vunpack.c.l.b16 %v37
    %v538 = vunpack.c.h.b16 %v37
    %v539 = vunpack.c.l.b16 %v38
    %v540 = vunpack.c.h.b16 %v38
    %v541 = vunpack.c.l.b16 %v39
    %v542 = vunpack.c.h.b16 %v39
    %v543 = vunpack.c.l.b16 %v40
    %v544 = vunpack.c.h.b16 %v40
    %v545 = vunpack.c.l.b16 %v41
    %v546 = vunpack.c.h.b16 %v41
    %v547 = vunpack.c.l.b16 %v42
    %v548 = vunpack.c.h.b16 %v42
    %v549 = vunpack.c.l.b16 %v43
    %v550 = vunpack.c.h.b16 %v43
    %v551 = vunpack.c.l.b16 %v44
    %v552 = vunpack.c.h.b16 %v44
    %v553 = vunpack.c.l.b16 %v45
    %v554 = vunpack.c.h.b16 %v45
    %v555 = vunpack.c.l.b16 %v46
    %v556 = vunpack.c.h.b16 %v46
    %v557 = vunpack.c.l.b16 %v47
    %v558 = vunpack.c.h.b16 %v47
    %v559 = vunpack.c.l.b16 %v48
    %v560 = vunpack.c.h.b16 %v48
    %v561 = vunpack.c.l.b16 %v49
    %v562 = vunpack.c.h.b16 %v49
    %v563 = vunpack.c.l.b16 %v50
    %v564 = vunpack.c.h.b16 %v50
    %v565 = vunpack.c.l.b16 %v51
    %v566 = vunpack.c.h.b16 %v51
    %v567 = vunpack.c.l.b16 %v52
    %v568 = vunpack.c.h.b16 %v52
    %v569 = vunpack.c.l.b16 %v53
    %v570 = vunpack.c.h.b16 %v53
    %v571 = vunpack.c.l.b16 %v54
    %v572 = vunpack.c.h.b16 %v54
    %v573 = vunpack.c.l.b16 %v55
    %v574 = vunpack.c.h.b16 %v55
    %v575 = vunpack.c.l.b16 %v56
    %v576 = vunpack.c.h.b16 %v56
    %v577 = vunpack.c.l.b16 %v57
    %v578 = vunpack.c.h.b16 %v57
    %v579 = vunpack.c.l.b16 %v58
    %v580 = vunpack.c.h.b16 %v58
    %v581 = vunpack.c.l.b16 %v59
    %v582 = vunpack.c.h.b16 %v59
    %v583 = vunpack.c.l.b16 %v60
    %v584 = vunpack.c.h.b16 %v60
    %v585 = vunpack.c.l.b16 %v61
    %v586 = vunpack.c.h.b16 %v61
    %v587 = vunpack.c.l.b16 %v62
    %v588 = vunpack.c.h.b16 %v62
    %v589 = vunpack.c.l.b16 %v63
    %v590 = vunpack.c.h.b16 %v63
    %v591 = vunpack.c.l.b16 %v64
    %v592 = vunpack.c.h.b16 %v64
    %v593 = vunpack.c.l.b16 %v65
    %v594 = vunpack.c.h.b16 %v65
    %v595 = vunpack.c.l.b16 %v66
    %v596 = vunpack.c.h.b16 %v66
    %v597 = vunpack.c.l.b16 %v67
    %v598 = vunpack.c.h.b16 %v67
    %v599 = vunpack.c.l.b16 %v68
    %v600 = vunpack.c.h.b16 %v68
    %v601 = vunpack.c.l.b16 %v69
    %v602 = vunpack.c.h.b16 %v69
    %v603 = vunpack.c.l.b16 %v70
    %v604 = vunpack.c.h.b16 %v70
    %v605 = vunpack.c.l.b16 %v71
    %v606 = vunpack.c.h.b16 %v71
    %v607 = vunpack.c.l.b16 %v72
    %v608 = vunpack.c.h.b16 %v72
    %v609 = vunpack.c.l.b16 %v73
    %v610 = vunpack.c.h.b16 %v73
    %v611 = vunpack.c.l.b16 %v74
    %v612 = vunpack.c.h.b16 %v74
    %v613 = vunpack.c.l.b16 %v75
    %v614 = vunpack.c.h.b16 %v75
    %v615 = vunpack.c.l.b16 %v76
    %v616 = vunpack.c.h.b16 %v76
    %v617 = vunpack.c.l.b16 %v77
    %v618 = vunpack.c.h.b16 %v77
    %v619 = vunpack.c.l.b16 %v78
    %v620 = vunpack.c.h.b16 %v78
    %v621 = vunpack.c.l.b16 %v79
    %v622 = vunpack.c.h.b16 %v79
    %v623 = vunpack.c.l.b16 %v80
    %v624 = vunpack.c.h.b16 %v80
    %v625 = vunpack.c.l.b16 %v81
    %v626 = vunpack.c.h.b16 %v81
    %v627 = vunpack.c.l.b16 %v82
    %v628 = vunpack.c.h.b16 %v82
    %v629 = vunpack.c.l.b16 %v83
    %v630 = vunpack.c.h.b16 %v83
    %v631 = vunpack.c.l.b16 %v84
    %v632 = vunpack.c.h.b16 %v84
    %v633 = vunpack.c.l.b16 %v85
    %v634 = vunpack.c.h.b16 %v85
    %v635 = vunpack.c.l.b16 %v86
    %v636 = vunpack.c.h.b16 %v86
    %v637 = vunpack.c.l.b16 %v87
    %v638 = vunpack.c.h.b16 %v87
    %v639 = vunpack.c.l.b16 %v88
    %v640 = vunpack.c.h.b16 %v88
    %v641 = vunpack.c.l.b16 %v89
    %v642 = vunpack.c.h.b16 %v89
    %v643 = vunpack.c.l.b16 %v90
    %v644 = vunpack.c.h.b16 %v90
    %v645 = vunpack.c.l.b16 %v91
    %v646 = vunpack.c.h.b16 %v91
    %v647 = vunpack.c.l.b16 %v92
    %v648 = vunpack.c.h.b16 %v92
    %v649 = vunpack.c.l.b16 %v93
    %v650 = vunpack.c.h.b16 %v93
    %v651 = vunpack.c.l.b16 %v94
    %v652 = vunpack.c.h.b16 %v94
    %v653 = vunpack.c.l.b16 %v95
    %v654 = vunpack.c.h.b16 %v95
    %v655 = vunpack.c.l.b16 %v96
    %v656 = vunpack.c.h.b16 %v96
    %v657 = vunpack.c.l.b16 %v97
    %v658 = vunpack.c.h.b16 %v97
    %v659 = vunpack.c.l.b16 %v98
    %v660 = vunpack.c.h.b16 %v98
    %v661 = vunpack.c.l.b16 %v99
    %v662 = vunpack.c.h.b16 %v99
    %v663 = vunpack.c.l.b16 %v100
    %v664 = vunpack.c.h.b16 %v100
    %v665 = vunpack.c.l.b16 %v101
    %v666 = vunpack.c.h.b16 %v101
    %v667 = vunpack.c.l.b16 %v102
    %v668 = vunpack.c.h.b16 %v102
    %v669 = vunpack.c.l.b16 %v103
    %v670 = vunpack.c.h.b16 %v103
    %v671 = vunpack.c.l.b16 %v104
    %v672 = vunpack.c.h.b16 %v104
    %v673 = vunpack.c.l.b16 %v105
    %v674 = vunpack.c.h.b16 %v105
    %v675 = vunpack.c.l.b16 %v106
    %v676 = vunpack.c.h.b16 %v106
    %v677 = vunpack.c.l.b16 %v107
    %v678 = vunpack.c.h.b16 %v107
    %v679 = vunpack.c.l.b16 %v108
    %v680 = vunpack.c.h.b16 %v108
    %v681 = vunpack.c.l.b16 %v109
    %v682 = vunpack.c.h.b16 %v109
    %v683 = vunpack.c.l.b16 %v110
    %v684 = vunpack.c.h.b16 %v110
    %v685 = vunpack.c.l.b16 %v111
    %v686 = vunpack.c.h.b16 %v111
    %v687 = vunpack.c.l.b16 %v112
    %v688 = vunpack.c.h.b16 %v112
    %v689 = vunpack.c.l.b16 %v113
    %v690 = vunpack.c.h.b16 %v113
    %v691 = vunpack.c.l.b16 %v114
    %v692 = vunpack.c.h.b16 %v114
    %v693 = vunpack.c.l.b16 %v115
    %v694 = vunpack.c.h.b16 %v115
    %v695 = vunpack.c.l.b16 %v116
    %v696 = vunpack.c.h.b16 %v116
    %v697 = vunpack.c.l.b16 %v117
    %v698 = vunpack.c.h.b16 %v117
    %v699 = vunpack.c.l.b16 %v118
    %v700 = vunpack.c.h.b16 %v118
    %v701 = vunpack.c.l.b16 %v119
    %v702 = vunpack.c.h.b16 %v119
    %v703 = vunpack.c.l.b16 %v120
    %v704 = vunpack.c.h.b16 %v120
    %v705 = vunpack.c.l.b16 %v121
    %v706 = vunpack.c.h.b16 %v121
    %v707 = vunpack.c.l.b16 %v122
    %v708 = vunpack.c.h.b16 %v122
    %v709 = vunpack.c.l.b16 %v123
    %v710 = vunpack.c.h.b16 %v123
    %v711 = vunpack.c.l.b16 %v124
    %v712 = vunpack.c.h.b16 %v124
    %v713 = vunpack.c.l.b16 %v125
    %v714 = vunpack.c.h.b16 %v125
    %v715 = vunpack.c.l.b16 %v126
    %v716 = vunpack.c.h.b16 %v126
    %v717 = vunpack.c.l.b16 %v127
    %v718 = vunpack.c.h.b16 %v127
    %v719 = vunpack.c.l.b16 %v128
    %v720 = vunpack.c.h.b16 %v128
    %v721 = vunpack.c.l.b16 %v129
    %v722 = vunpack.c.h.b16 %v129
    %v723 = vunpack.c.l.b16 %v130
    %v724 = vunpack.c.h.b16 %v130
    %v725 = vunpack.c.l.b16 %v131
    %v726 = vunpack.c.h.b16 %v131
    %v727 = vunpack.c.l.b16 %v132
    %v728 = vunpack.c.h.b16 %v132
    %v729 = vunpack.c.l.b16 %v133
    %v730 = vunpack.c.h.b16 %v133
    %v731 = vunpack.c.l.b16 %v134
    %v732 = vunpack.c.h.b16 %v134
    %v733 = vunpack.c.l.b16 %v135
    %v734 = vunpack.c.h.b16 %v135
    %v735 = vunpack.c.l.b16 %v136
    %v736 = vunpack.c.h.b16 %v136
    %v737 = vunpack.c.l.b16 %v137
    %v738 = vunpack.c.h.b16 %v137
    %v739 = vunpack.c.l.b16 %v138
    %v740 = vunpack.c.h.b16 %v138
    %v741 = vunpack.c.l.b16 %v139
    %v742 = vunpack.c.h.b16 %v139
    %v743 = vunpack.c.l.b16 %v140
    %v744 = vunpack.c.h.b16 %v140
    %v745 = vunpack.c.l.b16 %v141
    %v746 = vunpack.c.h.b16 %v141
    %v747 = vunpack.c.l.b16 %v142
    %v748 = vunpack.c.h.b16 %v142
    %v749 = vunpack.c.l.b16 %v143
    %v750 = vunpack.c.h.b16 %v143
    %v751 = vunpack.c.l.b16 %v144
    %v752 = vunpack.c.h.b16 %v144
    %v753 = vunpack.c.l.b16 %v145
    %v754 = vunpack.c.h.b16 %v145
    %v755 = vunpack.c.l.b16 %v146
    %v756 = vunpack.c.h.b16 %v146
    %v757 = vunpack.c.l.b16 %v147
    %v758 = vunpack.c.h.b16 %v147
    %v759 = vunpack.c.l.b16 %v148
    %v760 = vunpack.c.h.b16 %v148
    %v761 = vunpack.c.l.b16 %v149
    %v762 = vunpack.c.h.b16 %v149
    %v763 = vunpack.c.l.b16 %v150
    %v764 = vunpack.c.h.b16 %v150
    %v765 = vunpack.c.l.b16 %v151
    %v766 = vunpack.c.h.b16 %v151
    %v767 = vunpack.c.l.b16 %v152
    %v768 = vunpack.c.h.b16 %v152
    %v769 = vunpack.c.l.b16 %v153
    %v770 = vunpack.c.h.b16 %v153
    %v771 = vunpack.c.l.b16 %v154
    %v772 = vunpack.c.h.b16 %v154
    %v773 = vunpack.c.l.b16 %v155
    %v774 = vunpack.c.h.b16 %v155
    %v775 = vunpack.c.l.b16 %v156
    %v776 = vunpack.c.h.b16 %v156
    %v777 = vunpack.c.l.b16 %v157
    %v778 = vunpack.c.h.b16 %v157
    %v779 = vunpack.c.l.b16 %v158
    %v780 = vunpack.c.h.b16 %v158
    %v781 = vunpack.c.l.b16 %v159
    %v782 = vunpack.c.h.b16 %v159
    %v783 = vunpack.c.l.b16 %v160
    %v784 = vunpack.c.h.b16 %v160
    %v785 = vunpack.c.l.b16 %v161
    %v786 = vunpack.c.h.b16 %v161
    %v787 = vunpack.c.l.b16 %v162
    %v788 = vunpack.c.h.b16 %v162
    %v789 = vunpack.c.l.b16 %v163
    %v790 = vunpack.c.h.b16 %v163
    %v791 = vunpack.c.l.b16 %v164
    %v792 = vunpack.c.h.b16 %v164
    %v793 = vunpack.c.l.b16 %v165
    %v794 = vunpack.c.h.b16 %v165
    %v795 = vunpack.c.l.b16 %v166
    %v796 = vunpack.c.h.b16 %v166
    %v797 = vunpack.c.l.b16 %v167
    %v798 = vunpack.c.h.b16 %v167
    %v799 = vunpack.c.l.b16 %v168
    %v800 = vunpack.c.h.b16 %v168
    %v801 = vunpack.c.l.b16 %v169
    %v802 = vunpack.c.h.b16 %v169
    %v803 = vunpack.c.l.b16 %v170
    %v804 = vunpack.c.h.b16 %v170
    %v805 = vunpack.c.l.b16 %v171
    %v806 = vunpack.c.h.b16 %v171
    %v807 = vunpack.c.l.b16 %v172
    %v808 = vunpack.c.h.b16 %v172
    %v809 = vunpack.c.l.b16 %v173
    %v810 = vunpack.c.h.b16 %v173
    %v811 = vunpack.c.l.b16 %v174
    %v812 = vunpack.c.h.b16 %v174
    %v813 = vunpack.c.l.b16 %v175
    %v814 = vunpack.c.h.b16 %v175
    %v815 = vunpack.c.l.b16 %v176
    %v816 = vunpack.c.h.b16 %v176
    %v817 = vunpack.c.l.b16 %v177
    %v818 = vunpack.c.h.b16 %v177
    %v819 = vunpack.c.l.b16 %v178
    %v820 = vunpack.c.h.b16 %v178
    %v821 = vunpack.c.l.b16 %v179
    %v822 = vunpack.c.h.b16 %v179
    %v823 = vunpack.c.l.b16 %v180
    %v824 = vunpack.c.h.b16 %v180
    %v825 = vunpack.c.l.b16 %v181
    %v826 = vunpack.c.h.b16 %v181
    %v827 = vunpack.c.l.b16 %v182
    %v828 = vunpack.c.h.b16 %v182
    %v829 = vunpack.c.l.b16 %v183
    %v830 = vunpack.c.h.b16 %v183
    %v831 = vunpack.c.l.b16 %v184
    %v832 = vunpack.c.h.b16 %v184
    %v833 = vunpack.c.l.b16 %v185
    %v834 = vunpack.c.h.b16 %v185
    %v835 = vunpack.c.l.b16 %v186
    %v836 = vunpack.c.h.b16 %v186
    %v837 = vunpack.c.l.b16 %v187
    %v838 = vunpack.c.h.b16 %v187
    %v839 = vunpack.c.l.b16 %v188
    %v840 = vunpack.c.h.b16 %v188
    %v841 = vunpack.c.l.b16 %v189
    %v842 = vunpack.c.h.b16 %v189
    %v843 = vunpack.c.l.b16 %v190
    %v844 = vunpack.c.h.b16 %v190
    %v845 = vunpack.c.l.b16 %v191
    %v846 = vunpack.c.h.b16 %v191
    %v847 = vunpack.c.l.b16 %v192
    %v848 = vunpack.c.h.b16 %v192
    %v849 = vunpack.c.l.b16 %v193
    %v850 = vunpack.c.h.b16 %v193
    %v851 = vunpack.c.l.b16 %v194
    %v852 = vunpack.c.h.b16 %v194
    %v853 = vunpack.c.l.b16 %v195
    %v854 = vunpack.c.h.b16 %v195
    %v855 = vunpack.c.l.b16 %v196
    %v856 = vunpack.c.h.b16 %v196
    %v857 = vunpack.c.l.b16 %v197
    %v858 = vunpack.c.h.b16 %v197
    %v859 = vunpack.c.l.b16 %v198
    %v860 = vunpack.c.h.b16 %v198
    %v861 = vunpack.c.l.b16 %v199
    %v862 = vunpack.c.h.b16 %v199
    %v863 = vunpack.c.l.b16 %v200
    %v864 = vunpack.c.h.b16 %v200
    %v865 = vunpack.c.l.b16 %v201
    %v866 = vunpack.c.h.b16 %v201
    %v867 = vunpack.c.l.b16 %v202
    %v868 = vunpack.c.h.b16 %v202
    %v869 = vunpack.c.l.b16 %v203
    %v870 = vunpack.c.h.b16 %v203
    %v871 = vunpack.c.l.b16 %v204
    %v872 = vunpack.c.h.b16 %v204
    %v873 = vunpack.c.l.b16 %v205
    %v874 = vunpack.c.h.b16 %v205
    %v875 = vunpack.c.l.b16 %v206
    %v876 = vunpack.c.h.b16 %v206
    %v877 = vunpack.c.l.b16 %v207
    %v878 = vunpack.c.h.b16 %v207
    %v879 = vunpack.c.l.b16 %v208
    %v880 = vunpack.c.h.b16 %v208
    %v881 = vunpack.c.l.b16 %v209
    %v882 = vunpack.c.h.b16 %v209
    %v883 = vunpack.c.l.b16 %v210
    %v884 = vunpack.c.h.b16 %v210
    %v885 = vunpack.c.l.b16 %v211
    %v886 = vunpack.c.h.b16 %v211
    %v887 = vunpack.c.l.b16 %v212
    %v888 = vunpack.c.h.b16 %v212
    %v889 = vunpack.c.l.b16 %v213
    %v890 = vunpack.c.h.b16 %v213
    %v891 = vunpack.c.l.b16 %v214
    %v892 = vunpack.c.h.b16 %v214
    %v893 = vunpack.c.l.b16 %v215
    %v894 = vunpack.c.h.b16 %v215
    %v895 = vunpack.c.l.b16 %v216
    %v896 = vunpack.c.h.b16 %v216
    %v897 = vunpack.c.l.b16 %v217
    %v898 = vunpack.c.h.b16 %v217
    %v899 = vunpack.c.l.b16 %v218
    %v900 = vunpack.c.h.b16 %v218
    %v901 = vunpack.c.l.b16 %v219
    %v902 = vunpack.c.h.b16 %v219
    %v903 = vunpack.c.l.b16 %v220
    %v904 = vunpack.c.h.b16 %v220
    %v905 = vunpack.c.l.b16 %v221
    %v906 = vunpack.c.h.b16 %v221
    %v907 = vunpack.c.l.b16 %v222
    %v908 = vunpack.c.h.b16 %v222
    %v909 = vunpack.c.l.b16 %v223
    %v910 = vunpack.c.h.b16 %v223
    %v911 = vunpack.c.l.b16 %v224
    %v912 = vunpack.c.h.b16 %v224
    %v913 = vunpack.c.l.b16 %v225
    %v914 = vunpack.c.h.b16 %v225
    %v915 = vunpack.c.l.b16 %v226
    %v916 = vunpack.c.h.b16 %v226
    %v917 = vunpack.c.l.b16 %v227
    %v918 = vunpack.c.h.b16 %v227
    %v919 = vunpack.c.l.b16 %v228
    %v920 = vunpack.c.h.b16 %v228
    %v921 = vunpack.c.l.b16 %v229
    %v922 = vunpack.c.h.b16 %v229
    %v923 = vunpack.c.l.b16 %v230
    %v924 = vunpack.c.h.b16 %v230
    %v925 = vunpack.c.l.b16 %v231
    %v926 = vunpack.c.h.b16 %v231
    %v927 = vunpack.c.l.b16 %v232
    %v928 = vunpack.c.h.b16 %v232
    %v929 = vunpack.c.l.b16 %v233
    %v930 = vunpack.c.h.b16 %v233
    %v931 = vunpack.c.l.b16 %v234
    %v932 = vunpack.c.h.b16 %v234
    %v933 = vunpack.c.l.b16 %v235
    %v934 = vunpack.c.h.b16 %v235
    %v935 = vunpack.c.l.b16 %v236
    %v936 = vunpack.c.h.b16 %v236
    %v937 = vunpack.c.l.b16 %v237
    %v938 = vunpack.c.h.b16 %v237
    %v939 = vunpack.c.l.b16 %v238
    %v940 = vunpack.c.h.b16 %v238
    %v941 = vunpack.c.l.b16 %v239
    %v942 = vunpack.c.h.b16 %v239
    %v943 = vunpack.c.l.b16 %v240
    %v944 = vunpack.c.h.b16 %v240
    %v945 = vunpack.c.l.b16 %v241
    %v946 = vunpack.c.h.b16 %v241
    %v947 = vunpack.c.l.b16 %v242
    %v948 = vunpack.c.h.b16 %v242
    %v949 = vunpack.c.l.b16 %v243
    %v950 = vunpack.c.h.b16 %v243
    %v951 = vunpack.c.l.b16 %v244
    %v952 = vunpack.c.h.b16 %v244
    %v953 = vunpack.c.l.b16 %v245
    %v954 = vunpack.c.h.b16 %v245
    %v955 = vunpack.c.l.b16 %v246
    %v956 = vunpack.c.h.b16 %v246
    %v957 = vunpack.c.l.b16 %v247
    %v958 = vunpack.c.h.b16 %v247
    %v959 = vunpack.c.l.b16 %v248
    %v960 = vunpack.c.h.b16 %v248
    %v961 = vunpack.c.l.b16 %v249
    %v962 = vunpack.c.h.b16 %v249
    %v963 = vunpack.c.l.b16 %v250
    %v964 = vunpack.c.h.b16 %v250
    %v965 = vunpack.c.l.b16 %v251
    %v966 = vunpack.c.h.b16 %v251
    %v967 = vunpack.c.l.b16 %v252
    %v968 = vunpack.c.h.b16 %v252
    %v969 = vunpack.c.l.b16 %v253
    %v970 = vunpack.c.h.b16 %v253
    %v971 = vunpack.c.l.b16 %v254
    %v972 = vunpack.c.h.b16 %v254
    %v973 = vunpack.c.l.b16 %v255
    %v974 = vunpack.c.h.b16 %v255
    %v975 = vpack.c.b16 %v531, %v527
    %v976 = vpack.c.b16 %v532, %v528
    %v977 = vpack.c.b16 %v533, %v529
    %v978 = vpack.c.b16 %v534, %v530
    %v979 = vpack.c.b16 %v539, %v535
    %v980 = vpack.c.b16 %v540, %v536
    %v981 = vpack.c.b16 %v541, %v537
    %v982 = vpack.c.b16 %v542, %v538
    %v983 = vpack.c.b16 %v547, %v543
    %v984 = vpack.c.b16 %v548, %v544
    %v985 = vpack.c.b16 %v549, %v545
    %v986 = vpack.c.b16 %v550, %v546
    %v987 = vpack.c.b16 %v555, %v551
    %v988 = vpack.c.b16 %v556, %v552
    %v989 = vpack.c.b16 %v557, %v553
    %v990 = vpack.c.b16 %v558, %v554
    %v991 = vpack.c.b16 %v563, %v559
    %v992 = vpack.c.b16 %v564, %v560
    %v993 = vpack.c.b16 %v565, %v561
    %v994 = vpack.c.b16 %v566, %v562
    %v995 = vpack.c.b16 %v571, %v567
    %v996 = vpack.c.b16 %v572, %v568
    %v997 = vpack.c.b16 %v573, %v569
    %v998 = vpack.c.b16 %v574, %v570
    %v999 = vpack.c.b16 %v579, %v575
    %v1000 = vpack.c.b16 %v580, %v576
    %v1001 = vpack.c.b16 %v581, %v577
    %v1002 = vpack.c.b16 %v582, %v578
    %v1003 = vpack.c.b16 %v587, %v583
    %v1004 = vpack.c.b16 %v588, %v584
    %v1005 = vpack.c.b16 %v589, %v585
    %v1006 = vpack.c.b16 %v590, %v586
    %v1007 = vpack.c.b16 %v595, %v591
    %v1008 = vpack.c.b16 %v596, %v592
    %v1009 = vpack.c.b16 %v597, %v593
    %v1010 = vpack.c.b16 %v598, %v594
    %v1011 = vpack.c.b16 %v603, %v599
    %v1012 = vpack.c.b16 %v604, %v600
    %v1013 = vpack.c.b16 %v605, %v601
    %v1014 = vpack.c.b16 %v606, %v602
    %v1015 = vpack.c.b16 %v611, %v607
    %v1016 = vpack.c.b16 %v612, %v608
    %v1017 = vpack.c.b16 %v613, %v609
    %v1018 = vpack.c.b16 %v614, %v610
    %v1019 = vpack.c.b16 %v619, %v615
    %v1020 = vpack.c.b16 %v620, %v616
    %v1021 = vpack.c.b16 %v621, %v617
    %v1022 = vpack.c.b16 %v622, %v618
    %v1023 = vpack.c.b16 %v627, %v623
    %v1024 = vpack.c.b16 %v628, %v624
    %v1025 = vpack.c.b16 %v629, %v625
    %v1026 = vpack.c.b16 %v630, %v626
    %v1027 = vpack.c.b16 %v635, %v631
    %v1028 = vpack.c.b16 %v636, %v632
    %v1029 = vpack.c.b16 %v637, %v633
    %v1030 = vpack.c.b16 %v638, %v634
    %v1031 = vpack.c.b16 %v643, %v639
    %v1032 = vpack.c.b16 %v644, %v640
    %v1033 = vpack.c.b16 %v645, %v641
    %v1034 = vpack.c.b16 %v646, %v642
    %v1035 = vpack.c.b16 %v651, %v647
    %v1036 = vpack.c.b16 %v652, %v648
    %v1037 = vpack.c.b16 %v653, %v649
    %v1038 = vpack.c.b16 %v654, %v650
    %v1039 = vpack.c.b16 %v659, %v655
    %v1040 = vpack.c.b16 %v660, %v656
    %v1041 = vpack.c.b16 %v661, %v657
    %v1042 = vpack.c.b16 %v662, %v658
    %v1043 = vpack.c.b16 %v667, %v663
    %v1044 = vpack.c.b16 %v668, %v664
    %v1045 = vpack.c.b16 %v669, %v665
    %v1046 = vpack.c.b16 %v670, %v666
    %v1047 = vpack.c.b16 %v675, %v671
    %v1048 = vpack.c.b16 %v676, %v672
    %v1049 = vpack.c.b16 %v677, %v673
    %v1050 = vpack.c.b16 %v678, %v674
    %v1051 = vpack.c.b16 %v683, %v679
    %v1052 = vpack.c.b16 %v684, %v680
    %v1053 = vpack.c.b16 %v685, %v681
    %v1054 = vpack.c.b16 %v686, %v682
    %v1055 = vpack.c.b16 %v691, %v687
    %v1056 = vpack.c.b16 %v692, %v688
    %v1057 = vpack.c.b16 %v693, %v689
    %v1058 = vpack.c.b16 %v694, %v690
    %v1059 = vpack.c.b16 %v699, %v695
    %v1060 = vpack.c.b16 %v700, %v696
    %v1061 = vpack.c.b16 %v701, %v697
    %v1062 = vpack.c.b16 %v702, %v698
    %v1063 = vpack.c.b16 %v707, %v703
    %v1064 = vpack.c.b16 %v708, %v704
    %v1065 = vpack.c.b16 %v709, %v705
    %v1066 = vpack.c.b16 %v710, %v706
    %v1067 = vpack.c.b16 %v715, %v711
    %v1068 = vpack.c.b16 %v716, %v712
    %v1069 = vpack.c.b16 %v717, %v713
    %v1070 = vpack.c.b16 %v718, %v714
    %v1071 = vpack.c.b16 %v723, %v719
    %v1072 = vpack.c.b16 %v724, %v720
    %v1073 = vpack.c.b16 %v725, %v721
    %v1074 = vpack.c.b16 %v726, %v722
    %v1075 = vpack.c.b16 %v731, %v727
    %v1076 = vpack.c.b16 %v732, %v728
    %v1077 = vpack.c.b16 %v733, %v729
    %v1078 = vpack.c.b16 %v734, %v730
    %v1079 = vpack.c.b16 %v739, %v735
    %v1080 = vpack.c.b16 %v740, %v736
    %v1081 = vpack.c.b16 %v741, %v737
    %v1082 = vpack.c.b16 %v742, %v738
    %v1083 = vpack.c.b16 %v747, %v743
    %v1084 = vpack.c.b16 %v748, %v744
    %v1085 = vpack.c.b16 %v749, %v745
    %v1086 = vpack.c.b16 %v750, %v746
    %v1087 = vpack.c.b16 %v755, %v751
    %v1088 = vpack.c.b16 %v756, %v752
    %v1089 = vpack.c.b16 %v757, %v753
    %v1090 = vpack.c.b16 %v758, %v754
    %v1091 = vpack.c.b16 %v763, %v759
    %v1092 = vpack.c.b16 %v764, %v760
    %v1093 = vpack.c.b16 %v765, %v761
    %v1094 = vpack.c.b16 %v766, %v762
    %v1095 = vpack.c.b16 %v771, %v767
    %v1096 = vpack.c.b16 %v772, %v768
    %v1097 = vpack.c.b16 %v773, %v769
    %v1098 = vpack.c.b16 %v774, %v770
    %v1099 = vpack.c.b16 %v779, %v775
    %v1100 = vpack.c.b16 %v780, %v776
    %v1101 = vpack.c.b16 %v781, %v777
    %v1102 = vpack.c.b16 %v782, %v778
    %v1103 = vpack.c.b16 %v787, %v783
    %v1104 = vpack.c.b16 %v788, %v784
    %v1105 = vpack.c.b16 %v789, %v785
    %v1106 = vpack.c.b16 %v790, %v786
    %v1107 = vpack.c.b16 %v795, %v791
    %v1108 = vpack.c.b16 %v796, %v792
    %v1109 = vpack.c.b16 %v797, %v793
    %v1110 = vpack.c.b16 %v798, %v794
    %v1111 = vpack.c.b16 %v803, %v799
    %v1112 = vpack.c.b16 %v804, %v800
    %v1113 = vpack.c.b16 %v805, %v801
    %v1114 = vpack.c.b16 %v806, %v802
    %v1115 = vpack.c.b16 %v811, %v807
    %v1116 = vpack.c.b16 %v812, %v808
    %v1117 = vpack.c.b16 %v813, %v809
    %v1118 = vpack.c.b16 %v814, %v810
    %v1119 = vpack.c.b16 %v819, %v815
    %v1120 = vpack.c.b16 %v820, %v816
    %v1121 = vpack.c.b16 %v821, %v817
    %v1122 = vpack.c.b16 %v822, %v818
    %v1123 = vpack.c.b16 %v827, %v823
    %v1124 = vpack.c.b16 %v828, %v824
    %v1125 = vpack.c.b16 %v829, %v825
    %v1126 = vpack.c.b16 %v830, %v826
    %v1127 = vpack.c.b16 %v835, %v831
    %v1128 = vpack.c.b16 %v836, %v832
    %v1129 = vpack.c.b16 %v837, %v833
    %v1130 = vpack.c.b16 %v838, %v834
    %v1131 = vpack.c.b16 %v843, %v839
    %v1132 = vpack.c.b16 %v844, %v840
    %v1133 = vpack.c.b16 %v845, %v841
    %v1134 = vpack.c.b16 %v846, %v842
    %v1135 = vpack.c.b16 %v851, %v847
    %v1136 = vpack.c.b16 %v852, %v848
    %v1137 = vpack.c.b16 %v853, %v849
    %v1138 = vpack.c.b16 %v854, %v850
    %v1139 = vpack.c.b16 %v859, %v855
    %v1140 = vpack.c.b16 %v860, %v856
    %v1141 = vpack.c.b16 %v861, %v857
    %v1142 = vpack.c.b16 %v862, %v858
    %v1143 = vpack.c.b16 %v867, %v863
    %v1144 = vpack.c.b16 %v868, %v864
    %v1145 = vpack.c.b16 %v869, %v865
    %v1146 = vpack.c.b16 %v870, %v866
    %v1147 = vpack.c.b16 %v875, %v871
    %v1148 = vpack.c.b16 %v876, %v872
    %v1149 = vpack.c.b16 %v877, %v873
    %v1150 = vpack.c.b16 %v878, %v874
    %v1151 = vpack.c.b16 %v883, %v879
    %v1152 = vpack.c.b16 %v884, %v880
    %v1153 = vpack.c.b16 %v885, %v881
    %v1154 = vpack.c.b16 %v886, %v882
    %v1155 = vpack.c.b16 %v891, %v887
    %v1156 = vpack.c.b16 %v892, %v888
    %v1157 = vpack.c.b16 %v893, %v889
    %v1158 = vpack.c.b16 %v894, %v890
    %v1159 = vpack.c.b16 %v899, %v895
    %v1160 = vpack.c.b16 %v900, %v896
    %v1161 = vpack.c.b16 %v901, %v897
    %v1162 = vpack.c.b16 %v902, %v898
    %v1163 = vpack.c.b16 %v907, %v903
    %v1164 = vpack.c.b16 %v908, %v904
    %v1165 = vpack.c.b16 %v909, %v905
    %v1166 = vpack.c.b16 %v910, %v906
    %v1167 = vpack.c.b16 %v915, %v911
    %v1168 = vpack.c.b16 %v916, %v912
    %v1169 = vpack.c.b16 %v917, %v913
    %v1170 = vpack.c.b16 %v918, %v914
    %v1171 = vpack.c.b16 %v923, %v919
    %v1172 = vpack.c.b16 %v924, %v920
    %v1173 = vpack.c.b16 %v925, %v921
    %v1174 = vpack.c.b16 %v926, %v922
    %v1175 = vpack.c.b16 %v931, %v927
    %v1176 = vpack.c.b16 %v932, %v928
    %v1177 = vpack.c.b16 %v933, %v929
    %v1178 = vpack.c.b16 %v934, %v930
    %v1179 = vpack.c.b16 %v939, %v935
    %v1180 = vpack.c.b16 %v940, %v936
    %v1181 = vpack.c.b16 %v941, %v937
    %v1182 = vpack.c.b16 %v942, %v938
    %v1183 = vpack.c.b16 %v947, %v943
    %v1184 = vpack.c.b16 %v948, %v944
    %v1185 = vpack.c.b16 %v949, %v945
    %v1186 = vpack.c.b16 %v950, %v946
    %v1187 = vpack.c.b16 %v955, %v951
    %v1188 = vpack.c.b16 %v956, %v952
    %v1189 = vpack.c.b16 %v957, %v953
    %v1190 = vpack.c.b16 %v958, %v954
    %v1191 = vpack.c.b16 %v963, %v959
    %v1192 = vpack.c.b16 %v964, %v960
    %v1193 = vpack.c.b16 %v965, %v961
    %v1194 = vpack.c.b16 %v966, %v962
    %v1195 = vpack.c.b16 %v971, %v967
    %v1196 = vpack.c.b16 %v972, %v968
    %v1197 = vpack.c.b16 %v973, %v969
    %v1198 = vpack.c.b16 %v974, %v970
    %1423 = vmatprep.subr.bf16.mxu0 %v976
    %1424 = vmatpush1.bf16.msra.mxu0 %v975
    %1425 = vmatprep.subr.bf16.mxu0 %v980
    %1426 = vmatpush1.bf16.msra.mxu0 %v979
    %1427 = vmatprep.subr.bf16.mxu0 %v984
    %1428 = vmatpush1.bf16.msra.mxu0 %v983
    %1429 = vmatprep.subr.bf16.mxu0 %v988
    %1430 = vmatpush1.bf16.msra.mxu0 %v987
    %1431 = vmatprep.subr.bf16.mxu0 %v992
    %1432 = vmatpush1.bf16.msra.mxu0 %v991
    %1433 = vmatprep.subr.bf16.mxu0 %v996
    %1434 = vmatpush1.bf16.msra.mxu0 %v995
    %1435 = vmatprep.subr.bf16.mxu0 %v1000
    %1436 = vmatpush1.bf16.msra.mxu0 %v999
    %1437 = vmatprep.subr.bf16.mxu0 %v1004
    %1438 = vmatpush1.bf16.msra.mxu0 %v1003
    %1439 = vmatprep.subr.bf16.mxu0 %v1008
    %1440 = vmatpush1.bf16.msra.mxu0 %v1007
    %1441 = vmatprep.subr.bf16.mxu0 %v1012
    %1442 = vmatpush1.bf16.msra.mxu0 %v1011
    %1443 = vmatprep.subr.bf16.mxu0 %v1016
    %1444 = vmatpush1.bf16.msra.mxu0 %v1015
    %1445 = vmatprep.subr.bf16.mxu0 %v1020
    %1446 = vmatpush1.bf16.msra.mxu0 %v1019
    %1447 = vmatprep.subr.bf16.mxu0 %v1024
    %1448 = vmatpush1.bf16.msra.mxu0 %v1023
    %1449 = vmatprep.subr.bf16.mxu0 %v1028
    %1450 = vmatpush1.bf16.msra.mxu0 %v1027
    %1451 = vmatprep.subr.bf16.mxu0 %v1032
    %1452 = vmatpush1.bf16.msra.mxu0 %v1031
    %1453 = vmatprep.subr.bf16.mxu0 %v1036
    %1454 = vmatpush1.bf16.msra.mxu0 %v1035
    %1455 = vmatprep.mubr.bf16.mxu0 %v290
    %1456 = vmatmul.mubr.bf16.gmra.mrb[0].mxu0 %v289
    %v1457 = vpop.f32.mrb[0].mxu0
    %v1458 = vadd.f32 %v261, %v1457
    %v1459 = vpop.f32.mrb[0].mxu0
    %v1460 = vadd.f32 %v265, %v1459
    %v1461 = vpop.f32.mrb[0].mxu0
    %v1462 = vpop.f32.mrb[0].mxu0
    %1463 = vdwg.mxu0
    %1464 = vmatprep.subr.bf16.mxu0 %v1040
    %1465 = vmatpush1.bf16.msra.mxu0 %v1039
    %1466 = vmatprep.subr.bf16.mxu0 %v1044
    %1467 = vmatpush1.bf16.msra.mxu0 %v1043
    %1468 = vmatprep.subr.bf16.mxu0 %v1048
    %1469 = vmatpush1.bf16.msra.mxu0 %v1047
    %1470 = vmatprep.subr.bf16.mxu0 %v1052
    %1471 = vmatpush1.bf16.msra.mxu0 %v1051
    %1472 = vmatprep.subr.bf16.mxu0 %v1056
    %1473 = vmatpush1.bf16.msra.mxu0 %v1055
    %1474 = vmatprep.subr.bf16.mxu0 %v1060
    %1475 = vmatpush1.bf16.msra.mxu0 %v1059
    %1476 = vmatprep.subr.bf16.mxu0 %v1064
    %1477 = vmatpush1.bf16.msra.mxu0 %v1063
    %1478 = vmatprep.subr.bf16.mxu0 %v1068
    %1479 = vmatpush1.bf16.msra.mxu0 %v1067
    %1480 = vmatprep.subr.bf16.mxu0 %v1072
    %1481 = vmatpush1.bf16.msra.mxu0 %v1071
    %1482 = vmatprep.subr.bf16.mxu0 %v1076
    %1483 = vmatpush1.bf16.msra.mxu0 %v1075
    %1484 = vmatprep.subr.bf16.mxu0 %v1080
    %1485 = vmatpush1.bf16.msra.mxu0 %v1079
    %1486 = vmatprep.subr.bf16.mxu0 %v1084
    %1487 = vmatpush1.bf16.msra.mxu0 %v1083
    %1488 = vmatprep.subr.bf16.mxu0 %v1088
    %1489 = vmatpush1.bf16.msra.mxu0 %v1087
    %1490 = vmatprep.subr.bf16.mxu0 %v1092
    %1491 = vmatpush1.bf16.msra.mxu0 %v1091
    %1492 = vmatprep.subr.bf16.mxu0 %v1096
    %1493 = vmatpush1.bf16.msra.mxu0 %v1095
    %1494 = vmatprep.subr.bf16.mxu0 %v1100
    %1495 = vmatpush1.bf16.msra.mxu0 %v1099
    %1496 = vmatprep.mubr.bf16.mxu0 %v292
    %1497 = vmatmul.mubr.bf16.gmra.mrb[0].mxu0 %v291
    %v1498 = vpop.f32.mrb[0].mxu0
    %v1499 = vadd.f32 %v1458, %v1498
    %v1500 = vpop.f32.mrb[0].mxu0
    %v1501 = vadd.f32 %v1460, %v1500
    %v1502 = vpop.f32.mrb[0].mxu0
    %v1503 = vpop.f32.mrb[0].mxu0
    %1504 = vdwg.mxu0
    %1505 = vmatprep.subr.bf16.mxu0 %v1104
    %1506 = vmatpush1.bf16.msra.mxu0 %v1103
    %1507 = vmatprep.subr.bf16.mxu0 %v1108
    %1508 = vmatpush1.bf16.msra.mxu0 %v1107
    %1509 = vmatprep.subr.bf16.mxu0 %v1112
    %1510 = vmatpush1.bf16.msra.mxu0 %v1111
    %1511 = vmatprep.subr.bf16.mxu0 %v1116
    %1512 = vmatpush1.bf16.msra.mxu0 %v1115
    %1513 = vmatprep.subr.bf16.mxu0 %v1120
    %1514 = vmatpush1.bf16.msra.mxu0 %v1119
    %1515 = vmatprep.subr.bf16.mxu0 %v1124
    %1516 = vmatpush1.bf16.msra.mxu0 %v1123
    %1517 = vmatprep.subr.bf16.mxu0 %v1128
    %1518 = vmatpush1.bf16.msra.mxu0 %v1127
    %1519 = vmatprep.subr.bf16.mxu0 %v1132
    %1520 = vmatpush1.bf16.msra.mxu0 %v1131
    %1521 = vmatprep.subr.bf16.mxu0 %v1136
    %1522 = vmatpush1.bf16.msra.mxu0 %v1135
    %1523 = vmatprep.subr.bf16.mxu0 %v1140
    %1524 = vmatpush1.bf16.msra.mxu0 %v1139
    %1525 = vmatprep.subr.bf16.mxu0 %v1144
    %1526 = vmatpush1.bf16.msra.mxu0 %v1143
    %1527 = vmatprep.subr.bf16.mxu0 %v1148
    %1528 = vmatpush1.bf16.msra.mxu0 %v1147
    %1529 = vmatprep.subr.bf16.mxu0 %v1152
    %1530 = vmatpush1.bf16.msra.mxu0 %v1151
    %1531 = vmatprep.subr.bf16.mxu0 %v1156
    %1532 = vmatpush1.bf16.msra.mxu0 %v1155
    %1533 = vmatprep.subr.bf16.mxu0 %v1160
    %1534 = vmatpush1.bf16.msra.mxu0 %v1159
    %1535 = vmatprep.subr.bf16.mxu0 %v1164
    %1536 = vmatpush1.bf16.msra.mxu0 %v1163
    %1537 = vmatprep.mubr.bf16.mxu0 %v294
    %1538 = vmatmul.mubr.bf16.gmra.mrb[0].mxu0 %v293
    %v1539 = vpop.f32.mrb[0].mxu0
    %v1540 = vadd.f32 %v1499, %v1539
    %v1541 = vpop.f32.mrb[0].mxu0
    %v1542 = vadd.f32 %v1501, %v1541
    %v1543 = vpop.f32.mrb[0].mxu0
    %v1544 = vpop.f32.mrb[0].mxu0
    %1545 = vdwg.mxu0
    %1546 = vmatprep.subr.bf16.mxu0 %v1168
    %1547 = vmatpush1.bf16.msra.mxu0 %v1167
    %1548 = vmatprep.subr.bf16.mxu0 %v1172
    %1549 = vmatpush1.bf16.msra.mxu0 %v1171
    %1550 = vmatprep.subr.bf16.mxu0 %v1176
    %1551 = vmatpush1.bf16.msra.mxu0 %v1175
    %1552 = vmatprep.subr.bf16.mxu0 %v1180
    %1553 = vmatpush1.bf16.msra.mxu0 %v1179
    %1554 = vmatprep.subr.bf16.mxu0 %v1184
    %1555 = vmatpush1.bf16.msra.mxu0 %v1183
    %1556 = vmatprep.subr.bf16.mxu0 %v1188
    %1557 = vmatpush1.bf16.msra.mxu0 %v1187
    %1558 = vmatprep.subr.bf16.mxu0 %v1192
    %1559 = vmatpush1.bf16.msra.mxu0 %v1191
    %1560 = vmatprep.subr.bf16.mxu0 %v1196
    %1561 = vmatpush1.bf16.msra.mxu0 %v1195
    %1562 = vmatprep.subr.bf16.mxu0 0
    %1563 = vmatpush1.bf16.msra.mxu0 0
    %1564 = vmatprep.subr.bf16.mxu0 0
    %1565 = vmatpush1.bf16.msra.mxu0 0
    %1566 = vmatprep.subr.bf16.mxu0 0
    %1567 = vmatpush1.bf16.msra.mxu0 0
    %1568 = vmatprep.subr.bf16.mxu0 0
    %1569 = vmatpush1.bf16.msra.mxu0 0
    %1570 = vmatprep.subr.bf16.mxu0 0
    %1571 = vmatpush1.bf16.msra.mxu0 0
    %1572 = vmatprep.subr.bf16.mxu0 0
    %1573 = vmatpush1.bf16.msra.mxu0 0
    %1574 = vmatprep.subr.bf16.mxu0 0
    %1575 = vmatpush1.bf16.msra.mxu0 0
    %1576 = vmatprep.subr.bf16.mxu0 0
    %1577 = vmatpush1.bf16.msra.mxu0 0
    %1578 = vmatprep.mubr.bf16.mxu0 0
    %1579 = vmatmul.mubr.bf16.gmra.mrb[0].mxu0 %v295
    %v1580 = vpop.f32.mrb[0].mxu0
    %v1581 = vadd.f32 %v1540, %v1580
    %v1582 = vpop.f32.mrb[0].mxu0
    %v1583 = vadd.f32 %v1542, %v1582
    %v1584 = vpop.f32.mrb[0].mxu0
    %v1585 = vpop.f32.mrb[0].mxu0
    %1586 = vdwg.mxu0
    %1587 = vmatprep.subr.bf16.mxu0 %v978
    %1588 = vmatpush1.bf16.msra.mxu0 %v977
    %1589 = vmatprep.subr.bf16.mxu0 %v982
    %1590 = vmatpush1.bf16.msra.mxu0 %v981
    %1591 = vmatprep.subr.bf16.mxu0 %v986
    %1592 = vmatpush1.bf16.msra.mxu0 %v985
    %1593 = vmatprep.subr.bf16.mxu0 %v990
    %1594 = vmatpush1.bf16.msra.mxu0 %v989
    %1595 = vmatprep.subr.bf16.mxu0 %v994
    %1596 = vmatpush1.bf16.msra.mxu0 %v993
    %1597 = vmatprep.subr.bf16.mxu0 %v998
    %1598 = vmatpush1.bf16.msra.mxu0 %v997
    %1599 = vmatprep.subr.bf16.mxu0 %v1002
    %1600 = vmatpush1.bf16.msra.mxu0 %v1001
    %1601 = vmatprep.subr.bf16.mxu0 %v1006
    %1602 = vmatpush1.bf16.msra.mxu0 %v1005
    %1603 = vmatprep.subr.bf16.mxu0 %v1010
    %1604 = vmatpush1.bf16.msra.mxu0 %v1009
    %1605 = vmatprep.subr.bf16.mxu0 %v1014
    %1606 = vmatpush1.bf16.msra.mxu0 %v1013
    %1607 = vmatprep.subr.bf16.mxu0 %v1018
    %1608 = vmatpush1.bf16.msra.mxu0 %v1017
    %1609 = vmatprep.subr.bf16.mxu0 %v1022
    %1610 = vmatpush1.bf16.msra.mxu0 %v1021
    %1611 = vmatprep.subr.bf16.mxu0 %v1026
    %1612 = vmatpush1.bf16.msra.mxu0 %v1025
    %1613 = vmatprep.subr.bf16.mxu0 %v1030
    %1614 = vmatpush1.bf16.msra.mxu0 %v1029
    %1615 = vmatprep.subr.bf16.mxu0 %v1034
    %1616 = vmatpush1.bf16.msra.mxu0 %v1033
    %1617 = vmatprep.subr.bf16.mxu0 %v1038
    %1618 = vmatpush1.bf16.msra.mxu0 %v1037
    %1619 = vmatprep.mubr.bf16.mxu0 %v290
    %1620 = vmatmul.mubr.bf16.gmra.mrb[0].mxu0 %v289
    %v1621 = vpop.f32.mrb[0].mxu0
    %v1622 = vadd.f32 %v269, %v1621
    %v1623 = vpop.f32.mrb[0].mxu0
    %v1624 = vadd.f32 %v273, %v1623
    %v1625 = vpop.f32.mrb[0].mxu0
    %v1626 = vpop.f32.mrb[0].mxu0
    %1627 = vdwg.mxu0
    %1628 = vmatprep.subr.bf16.mxu0 %v1042
    %1629 = vmatpush1.bf16.msra.mxu0 %v1041
    %1630 = vmatprep.subr.bf16.mxu0 %v1046
    %1631 = vmatpush1.bf16.msra.mxu0 %v1045
    %1632 = vmatprep.subr.bf16.mxu0 %v1050
    %1633 = vmatpush1.bf16.msra.mxu0 %v1049
    %1634 = vmatprep.subr.bf16.mxu0 %v1054
    %1635 = vmatpush1.bf16.msra.mxu0 %v1053
    %1636 = vmatprep.subr.bf16.mxu0 %v1058
    %1637 = vmatpush1.bf16.msra.mxu0 %v1057
    %1638 = vmatprep.subr.bf16.mxu0 %v1062
    %1639 = vmatpush1.bf16.msra.mxu0 %v1061
    %1640 = vmatprep.subr.bf16.mxu0 %v1066
    %1641 = vmatpush1.bf16.msra.mxu0 %v1065
    %1642 = vmatprep.subr.bf16.mxu0 %v1070
    %1643 = vmatpush1.bf16.msra.mxu0 %v1069
    %1644 = vmatprep.subr.bf16.mxu0 %v1074
    %1645 = vmatpush1.bf16.msra.mxu0 %v1073
    %1646 = vmatprep.subr.bf16.mxu0 %v1078
    %1647 = vmatpush1.bf16.msra.mxu0 %v1077
    %1648 = vmatprep.subr.bf16.mxu0 %v1082
    %1649 = vmatpush1.bf16.msra.mxu0 %v1081
    %1650 = vmatprep.subr.bf16.mxu0 %v1086
    %1651 = vmatpush1.bf16.msra.mxu0 %v1085
    %1652 = vmatprep.subr.bf16.mxu0 %v1090
    %1653 = vmatpush1.bf16.msra.mxu0 %v1089
    %1654 = vmatprep.subr.bf16.mxu0 %v1094
    %1655 = vmatpush1.bf16.msra.mxu0 %v1093
    %1656 = vmatprep.subr.bf16.mxu0 %v1098
    %1657 = vmatpush1.bf16.msra.mxu0 %v1097
    %1658 = vmatprep.subr.bf16.mxu0 %v1102
    %1659 = vmatpush1.bf16.msra.mxu0 %v1101
    %1660 = vmatprep.mubr.bf16.mxu0 %v292
    %1661 = vmatmul.mubr.bf16.gmra.mrb[0].mxu0 %v291
    %v1662 = vpop.f32.mrb[0].mxu0
    %v1663 = vadd.f32 %v1622, %v1662
    %v1664 = vpop.f32.mrb[0].mxu0
    %v1665 = vadd.f32 %v1624, %v1664
    %v1666 = vpop.f32.mrb[0].mxu0
    %v1667 = vpop.f32.mrb[0].mxu0
    %1668 = vdwg.mxu0
    %1669 = vmatprep.subr.bf16.mxu0 %v1106
    %1670 = vmatpush1.bf16.msra.mxu0 %v1105
    %1671 = vmatprep.subr.bf16.mxu0 %v1110
    %1672 = vmatpush1.bf16.msra.mxu0 %v1109
    %1673 = vmatprep.subr.bf16.mxu0 %v1114
    %1674 = vmatpush1.bf16.msra.mxu0 %v1113
    %1675 = vmatprep.subr.bf16.mxu0 %v1118
    %1676 = vmatpush1.bf16.msra.mxu0 %v1117
    %1677 = vmatprep.subr.bf16.mxu0 %v1122
    %1678 = vmatpush1.bf16.msra.mxu0 %v1121
    %1679 = vmatprep.subr.bf16.mxu0 %v1126
    %1680 = vmatpush1.bf16.msra.mxu0 %v1125
    %1681 = vmatprep.subr.bf16.mxu0 %v1130
    %1682 = vmatpush1.bf16.msra.mxu0 %v1129
    %1683 = vmatprep.subr.bf16.mxu0 %v1134
    %1684 = vmatpush1.bf16.msra.mxu0 %v1133
    %1685 = vmatprep.subr.bf16.mxu0 %v1138
    %1686 = vmatpush1.bf16.msra.mxu0 %v1137
    %1687 = vmatprep.subr.bf16.mxu0 %v1142
    %1688 = vmatpush1.bf16.msra.mxu0 %v1141
    %1689 = vmatprep.subr.bf16.mxu0 %v1146
    %1690 = vmatpush1.bf16.msra.mxu0 %v1145
    %1691 = vmatprep.subr.bf16.mxu0 %v1150
    %1692 = vmatpush1.bf16.msra.mxu0 %v1149
    %1693 = vmatprep.subr.bf16.mxu0 %v1154
    %1694 = vmatpush1.bf16.msra.mxu0 %v1153
    %1695 = vmatprep.subr.bf16.mxu0 %v1158
    %1696 = vmatpush1.bf16.msra.mxu0 %v1157
    %1697 = vmatprep.subr.bf16.mxu0 %v1162
    %1698 = vmatpush1.bf16.msra.mxu0 %v1161
    %1699 = vmatprep.subr.bf16.mxu0 %v1166
    %1700 = vmatpush1.bf16.msra.mxu0 %v1165
    %1701 = vmatprep.mubr.bf16.mxu0 %v294
    %1702 = vmatmul.mubr.bf16.gmra.mrb[0].mxu0 %v293
    %v1703 = vpop.f32.mrb[0].mxu0
    %v1704 = vadd.f32 %v1663, %v1703
    %v1705 = vpop.f32.mrb[0].mxu0
    %v1706 = vadd.f32 %v1665, %v1705
    %v1707 = vpop.f32.mrb[0].mxu0
    %v1708 = vpop.f32.mrb[0].mxu0
    %1709 = vdwg.mxu0
    %1710 = vmatprep.subr.bf16.mxu0 %v1170
    %1711 = vmatpush1.bf16.msra.mxu0 %v1169
    %1712 = vmatprep.subr.bf16.mxu0 %v1174
    %1713 = vmatpush1.bf16.msra.mxu0 %v1173
    %1714 = vmatprep.subr.bf16.mxu0 %v1178
    %1715 = vmatpush1.bf16.msra.mxu0 %v1177
    %1716 = vmatprep.subr.bf16.mxu0 %v1182
    %1717 = vmatpush1.bf16.msra.mxu0 %v1181
    %1718 = vmatprep.subr.bf16.mxu0 %v1186
    %1719 = vmatpush1.bf16.msra.mxu0 %v1185
    %1720 = vmatprep.subr.bf16.mxu0 %v1190
    %1721 = vmatpush1.bf16.msra.mxu0 %v1189
    %1722 = vmatprep.subr.bf16.mxu0 %v1194
    %1723 = vmatpush1.bf16.msra.mxu0 %v1193
    %1724 = vmatprep.subr.bf16.mxu0 %v1198
    %1725 = vmatpush1.bf16.msra.mxu0 %v1197
    %1726 = vmatprep.subr.bf16.mxu0 0
    %1727 = vmatpush1.bf16.msra.mxu0 0
    %1728 = vmatprep.subr.bf16.mxu0 0
    %1729 = vmatpush1.bf16.msra.mxu0 0
    %1730 = vmatprep.subr.bf16.mxu0 0
    %1731 = vmatpush1.bf16.msra.mxu0 0
    %1732 = vmatprep.subr.bf16.mxu0 0
    %1733 = vmatpush1.bf16.msra.mxu0 0
    %1734 = vmatprep.subr.bf16.mxu0 0
    %1735 = vmatpush1.bf16.msra.mxu0 0
    %1736 = vmatprep.subr.bf16.mxu0 0
    %1737 = vmatpush1.bf16.msra.mxu0 0
    %1738 = vmatprep.subr.bf16.mxu0 0
    %1739 = vmatpush1.bf16.msra.mxu0 0
    %1740 = vmatprep.subr.bf16.mxu0 0
    %1741 = vmatpush1.bf16.msra.mxu0 0
    %1742 = vmatprep.mubr.bf16.mxu0 0
    %1743 = vmatmul.mubr.bf16.gmra.mrb[0].mxu0 %v295
    %v1744 = vpop.f32.mrb[0].mxu0
    %v1745 = vadd.f32 %v1704, %v1744
    %v1746 = vpop.f32.mrb[0].mxu0
    %v1747 = vadd.f32 %v1706, %v1746
    %v1748 = vpop.f32.mrb[0].mxu0
    %v1749 = vpop.f32.mrb[0].mxu0
    %1750 = vdwg.mxu0
    %v1751 = vmax.f32 %v1581, 0.0
    %v1752 = vmax.f32 %v1583, 0.0
    %v1753 = vmax.f32 %v1745, 0.0
    %v1754 = vmax.f32 %v1747, 0.0
    %v1755 = vpack.c.bf16 %v1751, %v1751
    %v1756 = vpack.c.bf16 %v1752, %v1752
    %v1757 = vpack.c.bf16 %v1753, %v1753
    %v1758 = vpack.c.bf16 %v1754, %v1754
    %v1759 = vld [vmem:[%s3] sm:$0xf]
    %v1760 = vld [vmem:[%s3 + $0x4] sm:$0xf]
    %v1761 = vld [vmem:[%s3 + $0x8] sm:$0xf]
    %v1762 = vld [vmem:[%s3 + $0xc] sm:$0xf]
    %v1763 = vld [vmem:[%s3 + $0x10] sm:$0xf]
    %v1764 = vld [vmem:[%s3 + $0x14] sm:$0xf]
    %v1765 = vld [vmem:[%s3 + $0x18] sm:$0xf]
    %v1766 = vld [vmem:[%s3 + $0x1c] sm:$0xf]
    %v1767 = vld [vmem:[%s3 + $0x20] sm:$0xf]
    %v1768 = vld [vmem:[%s3 + $0x24] sm:$0xf]
    %v1769 = vld [vmem:[%s3 + $0x28] sm:$0xf]
    %v1770 = vld [vmem:[%s3 + $0x2c] sm:$0xf]
    %v1771 = vld [vmem:[%s3 + $0x30] sm:$0xf]
    %v1772 = vld [vmem:[%s3 + $0x34] sm:$0xf]
    %v1773 = vld [vmem:[%s3 + $0x38] sm:$0xf]
    %v1774 = vld [vmem:[%s3 + $0x3c] sm:$0xf]
    %v1775 = vld [vmem:[%s3 + $0x40] sm:$0xf]
    %v1776 = vld [vmem:[%s3 + $0x44] sm:$0xf]
    %v1777 = vld [vmem:[%s3 + $0x48] sm:$0xf]
    %v1778 = vld [vmem:[%s3 + $0x4c] sm:$0xf]
    %v1779 = vld [vmem:[%s3 + $0x50] sm:$0xf]
    %v1780 = vld [vmem:[%s3 + $0x54] sm:$0xf]
    %v1781 = vld [vmem:[%s3 + $0x58] sm:$0xf]
    %v1782 = vld [vmem:[%s3 + $0x5c] sm:$0xf]
    %v1783 = vld [vmem:[%s3 + $0x60] sm:$0xf]
    %v1784 = vld [vmem:[%s3 + $0x64] sm:$0xf]
    %v1785 = vld [vmem:[%s3 + $0x68] sm:$0xf]
    %v1786 = vld [vmem:[%s3 + $0x6c] sm:$0xf]
    %v1787 = vld [vmem:[%s3 + $0x70] sm:$0xf]
    %v1788 = vld [vmem:[%s3 + $0x74] sm:$0xf]
    %v1789 = vld [vmem:[%s3 + $0x78] sm:$0xf]
    %v1790 = vld [vmem:[%s3 + $0x7c] sm:$0xf]
    %v1791 = vld [vmem:[%s3 + $0x80] sm:$0xf]
    %v1792 = vld [vmem:[%s3 + $0x84] sm:$0xf]
    %v1793 = vld [vmem:[%s3 + $0x88] sm:$0xf]
    %v1794 = vld [vmem:[%s3 + $0x8c] sm:$0xf]
    %v1795 = vld [vmem:[%s3 + $0x90] sm:$0xf]
    %v1796 = vld [vmem:[%s3 + $0x94] sm:$0xf]
    %v1797 = vld [vmem:[%s3 + $0x98] sm:$0xf]
    %v1798 = vld [vmem:[%s3 + $0x9c] sm:$0xf]
    %v1799 = vld [vmem:[%s3 + $0xa0] sm:$0xf]
    %v1800 = vld [vmem:[%s3 + $0xa4] sm:$0xf]
    %v1801 = vld [vmem:[%s3 + $0xa8] sm:$0xf]
    %v1802 = vld [vmem:[%s3 + $0xac] sm:$0xf]
    %v1803 = vld [vmem:[%s3 + $0xb0] sm:$0xf]
    %v1804 = vld [vmem:[%s3 + $0xb4] sm:$0xf]
    %v1805 = vld [vmem:[%s3 + $0xb8] sm:$0xf]
    %v1806 = vld [vmem:[%s3 + $0xbc] sm:$0xf]
    %v1807 = vld [vmem:[%s3 + $0xc0] sm:$0xf]
    %v1808 = vld [vmem:[%s3 + $0xc4] sm:$0xf]
    %v1809 = vld [vmem:[%s3 + $0xc8] sm:$0xf]
    %v1810 = vld [vmem:[%s3 + $0xcc] sm:$0xf]
    %v1811 = vld [vmem:[%s3 + $0xd0] sm:$0xf]
    %v1812 = vld [vmem:[%s3 + $0xd4] sm:$0xf]
    %v1813 = vld [vmem:[%s3 + $0xd8] sm:$0xf]
    %v1814 = vld [vmem:[%s3 + $0xdc] sm:$0xf]
    %v1815 = vld [vmem:[%s3 + $0xe0] sm:$0xf]
    %v1816 = vld [vmem:[%s3 + $0xe4] sm:$0xf]
    %v1817 = vld [vmem:[%s3 + $0xe8] sm:$0xf]
    %v1818 = vld [vmem:[%s3 + $0xec] sm:$0xf]
    %v1819 = vld [vmem:[%s3 + $0xf0] sm:$0xf]
    %v1820 = vld [vmem:[%s3 + $0xf4] sm:$0xf]
    %v1821 = vld [vmem:[%s3 + $0xf8] sm:$0xf]
    %v1822 = vld [vmem:[%s3 + $0xfc] sm:$0xf]
    %v1823 = vld [vmem:[%s4] sm:$0x1]
    %v1825 = vlaneseq
    %v1826 = vshrl.u32 %v1825, 7
    %v1827 = vsub.s32 0, %v1826
    %v1828 = vrot.slane %v1823, %v1827
    %v1894 = vunpack.c.l.b16 %v1759
    %v1895 = vunpack.c.l.b16 %v1760
    %v1896 = vunpack.c.l.b16 %v1761
    %v1897 = vunpack.c.l.b16 %v1762
    %v1898 = vunpack.c.l.b16 %v1763
    %v1899 = vunpack.c.l.b16 %v1764
    %v1900 = vunpack.c.l.b16 %v1765
    %v1901 = vunpack.c.l.b16 %v1766
    %v1902 = vunpack.c.l.b16 %v1767
    %v1903 = vunpack.c.l.b16 %v1768
    %v1904 = vunpack.c.l.b16 %v1769
    %v1905 = vunpack.c.l.b16 %v1770
    %v1906 = vunpack.c.l.b16 %v1771
    %v1907 = vunpack.c.l.b16 %v1772
    %v1908 = vunpack.c.l.b16 %v1773
    %v1909 = vunpack.c.l.b16 %v1774
    %v1910 = vunpack.c.l.b16 %v1775
    %v1911 = vunpack.c.l.b16 %v1776
    %v1912 = vunpack.c.l.b16 %v1777
    %v1913 = vunpack.c.l.b16 %v1778
    %v1914 = vunpack.c.l.b16 %v1779
    %v1915 = vunpack.c.l.b16 %v1780
    %v1916 = vunpack.c.l.b16 %v1781
    %v1917 = vunpack.c.l.b16 %v1782
    %v1918 = vunpack.c.l.b16 %v1783
    %v1919 = vunpack.c.l.b16 %v1784
    %v1920 = vunpack.c.l.b16 %v1785
    %v1921 = vunpack.c.l.b16 %v1786
    %v1922 = vunpack.c.l.b16 %v1787
    %v1923 = vunpack.c.l.b16 %v1788
    %v1924 = vunpack.c.l.b16 %v1789
    %v1925 = vunpack.c.l.b16 %v1790
    %v1926 = vunpack.c.l.b16 %v1791
    %v1927 = vunpack.c.l.b16 %v1792
    %v1928 = vunpack.c.l.b16 %v1793
    %v1929 = vunpack.c.l.b16 %v1794
    %v1930 = vunpack.c.l.b16 %v1795
    %v1931 = vunpack.c.l.b16 %v1796
    %v1932 = vunpack.c.l.b16 %v1797
    %v1933 = vunpack.c.l.b16 %v1798
    %v1934 = vunpack.c.l.b16 %v1799
    %v1935 = vunpack.c.l.b16 %v1800
    %v1936 = vunpack.c.l.b16 %v1801
    %v1937 = vunpack.c.l.b16 %v1802
    %v1938 = vunpack.c.l.b16 %v1803
    %v1939 = vunpack.c.l.b16 %v1804
    %v1940 = vunpack.c.l.b16 %v1805
    %v1941 = vunpack.c.l.b16 %v1806
    %v1942 = vunpack.c.l.b16 %v1807
    %v1943 = vunpack.c.l.b16 %v1808
    %v1944 = vunpack.c.l.b16 %v1809
    %v1945 = vunpack.c.l.b16 %v1810
    %v1946 = vunpack.c.l.b16 %v1811
    %v1947 = vunpack.c.l.b16 %v1812
    %v1948 = vunpack.c.l.b16 %v1813
    %v1949 = vunpack.c.l.b16 %v1814
    %v1950 = vunpack.c.l.b16 %v1815
    %v1951 = vunpack.c.l.b16 %v1816
    %v1952 = vunpack.c.l.b16 %v1817
    %v1953 = vunpack.c.l.b16 %v1818
    %v1954 = vunpack.c.l.b16 %v1819
    %v1955 = vunpack.c.l.b16 %v1820
    %v1956 = vunpack.c.l.b16 %v1821
    %v1957 = vunpack.c.l.b16 %v1822
    %v1958 = vpack.c.b16 %v1895, %v1894
    %v1959 = vpack.c.b16 %v1897, %v1896
    %v1960 = vpack.c.b16 %v1899, %v1898
    %v1961 = vpack.c.b16 %v1901, %v1900
    %v1962 = vpack.c.b16 %v1903, %v1902
    %v1963 = vpack.c.b16 %v1905, %v1904
    %v1964 = vpack.c.b16 %v1907, %v1906
    %v1965 = vpack.c.b16 %v1909, %v1908
    %v1966 = vpack.c.b16 %v1911, %v1910
    %v1967 = vpack.c.b16 %v1913, %v1912
    %v1968 = vpack.c.b16 %v1915, %v1914
    %v1969 = vpack.c.b16 %v1917, %v1916
    %v1970 = vpack.c.b16 %v1919, %v1918
    %v1971 = vpack.c.b16 %v1921, %v1920
    %v1972 = vpack.c.b16 %v1923, %v1922
    %v1973 = vpack.c.b16 %v1925, %v1924
    %v1974 = vpack.c.b16 %v1927, %v1926
    %v1975 = vpack.c.b16 %v1929, %v1928
    %v1976 = vpack.c.b16 %v1931, %v1930
    %v1977 = vpack.c.b16 %v1933, %v1932
    %v1978 = vpack.c.b16 %v1935, %v1934
    %v1979 = vpack.c.b16 %v1937, %v1936
    %v1980 = vpack.c.b16 %v1939, %v1938
    %v1981 = vpack.c.b16 %v1941, %v1940
    %v1982 = vpack.c.b16 %v1943, %v1942
    %v1983 = vpack.c.b16 %v1945, %v1944
    %v1984 = vpack.c.b16 %v1947, %v1946
    %v1985 = vpack.c.b16 %v1949, %v1948
    %v1986 = vpack.c.b16 %v1951, %v1950
    %v1987 = vpack.c.b16 %v1953, %v1952
    %v1988 = vpack.c.b16 %v1955, %v1954
    %v1989 = vpack.c.b16 %v1957, %v1956
    %2022 = vmatprep.subr.bf16.mxu0 0
    %2023 = vmatpush1.bf16.msra.mxu0 %v1958
    %2024 = vmatprep.subr.bf16.mxu0 0
    %2025 = vmatpush1.bf16.msra.mxu0 %v1959
    %2026 = vmatprep.subr.bf16.mxu0 0
    %2027 = vmatpush1.bf16.msra.mxu0 %v1960
    %2028 = vmatprep.subr.bf16.mxu0 0
    %2029 = vmatpush1.bf16.msra.mxu0 %v1961
    %2030 = vmatprep.subr.bf16.mxu0 0
    %2031 = vmatpush1.bf16.msra.mxu0 %v1962
    %2032 = vmatprep.subr.bf16.mxu0 0
    %2033 = vmatpush1.bf16.msra.mxu0 %v1963
    %2034 = vmatprep.subr.bf16.mxu0 0
    %2035 = vmatpush1.bf16.msra.mxu0 %v1964
    %2036 = vmatprep.subr.bf16.mxu0 0
    %2037 = vmatpush1.bf16.msra.mxu0 %v1965
    %2038 = vmatprep.subr.bf16.mxu0 0
    %2039 = vmatpush1.bf16.msra.mxu0 %v1966
    %2040 = vmatprep.subr.bf16.mxu0 0
    %2041 = vmatpush1.bf16.msra.mxu0 %v1967
    %2042 = vmatprep.subr.bf16.mxu0 0
    %2043 = vmatpush1.bf16.msra.mxu0 %v1968
    %2044 = vmatprep.subr.bf16.mxu0 0
    %2045 = vmatpush1.bf16.msra.mxu0 %v1969
    %2046 = vmatprep.subr.bf16.mxu0 0
    %2047 = vmatpush1.bf16.msra.mxu0 %v1970
    %2048 = vmatprep.subr.bf16.mxu0 0
    %2049 = vmatpush1.bf16.msra.mxu0 %v1971
    %2050 = vmatprep.subr.bf16.mxu0 0
    %2051 = vmatpush1.bf16.msra.mxu0 %v1972
    %2052 = vmatprep.subr.bf16.mxu0 0
    %2053 = vmatpush1.bf16.msra.mxu0 %v1973
    %2054 = vmatprep.mubr.bf16.mxu0 %v1756
    %2055 = vmatmul.mubr.bf16.gmra.mrb[0].mxu0 %v1755
    %v2056 = vpop.f32.mrb[0].mxu0
    %v2057 = vadd.f32 %v1828, %v2056
    %v2058 = vpop.f32.mrb[0].mxu0
    %v2059 = vpop.f32.mrb[0].mxu0
    %v2060 = vpop.f32.mrb[0].mxu0
    %2061 = vdwg.mxu0
    %2062 = vmatprep.subr.bf16.mxu0 0
    %2063 = vmatpush1.bf16.msra.mxu0 %v1974
    %2064 = vmatprep.subr.bf16.mxu0 0
    %2065 = vmatpush1.bf16.msra.mxu0 %v1975
    %2066 = vmatprep.subr.bf16.mxu0 0
    %2067 = vmatpush1.bf16.msra.mxu0 %v1976
    %2068 = vmatprep.subr.bf16.mxu0 0
    %2069 = vmatpush1.bf16.msra.mxu0 %v1977
    %2070 = vmatprep.subr.bf16.mxu0 0
    %2071 = vmatpush1.bf16.msra.mxu0 %v1978
    %2072 = vmatprep.subr.bf16.mxu0 0
    %2073 = vmatpush1.bf16.msra.mxu0 %v1979
    %2074 = vmatprep.subr.bf16.mxu0 0
    %2075 = vmatpush1.bf16.msra.mxu0 %v1980
    %2076 = vmatprep.subr.bf16.mxu0 0
    %2077 = vmatpush1.bf16.msra.mxu0 %v1981
    %2078 = vmatprep.subr.bf16.mxu0 0
    %2079 = vmatpush1.bf16.msra.mxu0 %v1982
    %2080 = vmatprep.subr.bf16.mxu0 0
    %2081 = vmatpush1.bf16.msra.mxu0 %v1983
    %2082 = vmatprep.subr.bf16.mxu0 0
    %2083 = vmatpush1.bf16.msra.mxu0 %v1984
    %2084 = vmatprep.subr.bf16.mxu0 0
    %2085 = vmatpush1.bf16.msra.mxu0 %v1985
    %2086 = vmatprep.subr.bf16.mxu0 0
    %2087 = vmatpush1.bf16.msra.mxu0 %v1986
    %2088 = vmatprep.subr.bf16.mxu0 0
    %2089 = vmatpush1.bf16.msra.mxu0 %v1987
    %2090 = vmatprep.subr.bf16.mxu0 0
    %2091 = vmatpush1.bf16.msra.mxu0 %v1988
    %2092 = vmatprep.subr.bf16.mxu0 0
    %2093 = vmatpush1.bf16.msra.mxu0 %v1989
    %2094 = vmatprep.mubr.bf16.mxu0 %v1758
    %2095 = vmatmul.mubr.bf16.gmra.mrb[0].mxu0 %v1757
    %v2096 = vpop.f32.mrb[0].mxu0
    %v2097 = vadd.f32 %v2057, %v2096
    %v2098 = vpop.f32.mrb[0].mxu0
    %v2099 = vpop.f32.mrb[0].mxu0
    %v2100 = vpop.f32.mrb[0].mxu0
    %2101 = vdwg.mxu0
    %v2102 = vmax.f32 %v2097, 0.0
    %v2103 = vpack.c.bf16 %v2102, %v2102
    %v2104 = vld [vmem:[%s5] sm:$0xf]
    %v2105 = vld [vmem:[%s5 + $0x4] sm:$0xf]
    %v2106 = vld [vmem:[%s5 + $0x8] sm:$0xf]
    %v2107 = vld [vmem:[%s5 + $0xc] sm:$0xf]
    %v2108 = vld [vmem:[%s5 + $0x10] sm:$0xf]
    %v2109 = vld [vmem:[%s5 + $0x14] sm:$0xf]
    %v2110 = vld [vmem:[%s5 + $0x18] sm:$0xf]
    %v2111 = vld [vmem:[%s5 + $0x1c] sm:$0xf]
    %v2112 = vld [vmem:[%s5 + $0x20] sm:$0xf]
    %v2113 = vld [vmem:[%s5 + $0x24] sm:$0xf]
    %v2114 = vld [vmem:[%s5 + $0x28] sm:$0xf]
    %v2115 = vld [vmem:[%s5 + $0x2c] sm:$0xf]
    %v2116 = vld [vmem:[%s5 + $0x30] sm:$0xf]
    %v2117 = vld [vmem:[%s5 + $0x34] sm:$0xf]
    %v2118 = vld [vmem:[%s5 + $0x38] sm:$0xf]
    %v2119 = vld [vmem:[%s5 + $0x3c] sm:$0xf]
    %v2120 = vld [vmem:[%s6] sm:$0x1]
    %v2122 = vlaneseq
    %v2123 = vshrl.u32 %v2122, 7
    %v2124 = vsub.s32 0, %v2123
    %v2125 = vrot.slane %v2120, %v2124
    %v2143 = vunpack.c.l.b16 %v2104
    %v2144 = vunpack.c.l.b16 %v2105
    %v2145 = vunpack.c.l.b16 %v2106
    %v2146 = vunpack.c.l.b16 %v2107
    %v2147 = vunpack.c.l.b16 %v2108
    %v2148 = vunpack.c.l.b16 %v2109
    %v2149 = vunpack.c.l.b16 %v2110
    %v2150 = vunpack.c.l.b16 %v2111
    %v2151 = vunpack.c.l.b16 %v2112
    %v2152 = vunpack.c.l.b16 %v2113
    %v2153 = vunpack.c.l.b16 %v2114
    %v2154 = vunpack.c.l.b16 %v2115
    %v2155 = vunpack.c.l.b16 %v2116
    %v2156 = vunpack.c.l.b16 %v2117
    %v2157 = vunpack.c.l.b16 %v2118
    %v2158 = vunpack.c.l.b16 %v2119
    %v2159 = vpack.c.b16 %v2144, %v2143
    %v2160 = vpack.c.b16 %v2146, %v2145
    %v2161 = vpack.c.b16 %v2148, %v2147
    %v2162 = vpack.c.b16 %v2150, %v2149
    %v2163 = vpack.c.b16 %v2152, %v2151
    %v2164 = vpack.c.b16 %v2154, %v2153
    %v2165 = vpack.c.b16 %v2156, %v2155
    %v2166 = vpack.c.b16 %v2158, %v2157
    %2175 = vmatprep.subr.bf16.mxu0 0
    %2176 = vmatpush1.bf16.msra.mxu0 %v2159
    %2177 = vmatprep.subr.bf16.mxu0 0
    %2178 = vmatpush1.bf16.msra.mxu0 %v2160
    %2179 = vmatprep.subr.bf16.mxu0 0
    %2180 = vmatpush1.bf16.msra.mxu0 %v2161
    %2181 = vmatprep.subr.bf16.mxu0 0
    %2182 = vmatpush1.bf16.msra.mxu0 %v2162
    %2183 = vmatprep.subr.bf16.mxu0 0
    %2184 = vmatpush1.bf16.msra.mxu0 %v2163
    %2185 = vmatprep.subr.bf16.mxu0 0
    %2186 = vmatpush1.bf16.msra.mxu0 %v2164
    %2187 = vmatprep.subr.bf16.mxu0 0
    %2188 = vmatpush1.bf16.msra.mxu0 %v2165
    %2189 = vmatprep.subr.bf16.mxu0 0
    %2190 = vmatpush1.bf16.msra.mxu0 %v2166
    %2191 = vmatprep.subr.bf16.mxu0 0
    %2192 = vmatpush1.bf16.msra.mxu0 0
    %2193 = vmatprep.subr.bf16.mxu0 0
    %2194 = vmatpush1.bf16.msra.mxu0 0
    %2195 = vmatprep.subr.bf16.mxu0 0
    %2196 = vmatpush1.bf16.msra.mxu0 0
    %2197 = vmatprep.subr.bf16.mxu0 0
    %2198 = vmatpush1.bf16.msra.mxu0 0
    %2199 = vmatprep.subr.bf16.mxu0 0
    %2200 = vmatpush1.bf16.msra.mxu0 0
    %2201 = vmatprep.subr.bf16.mxu0 0
    %2202 = vmatpush1.bf16.msra.mxu0 0
    %2203 = vmatprep.subr.bf16.mxu0 0
    %2204 = vmatpush1.bf16.msra.mxu0 0
    %2205 = vmatprep.subr.bf16.mxu0 0
    %2206 = vmatpush1.bf16.msra.mxu0 0
    %2207 = vmatprep.mubr.bf16.mxu0 0
    %2208 = vmatmul.mubr.bf16.gmra.mrb[0].mxu0 %v2103
    %v2209 = vpop.f32.mrb[0].mxu0
    %v2210 = vadd.f32 %v2125, %v2209
    %v2211 = vpop.f32.mrb[0].mxu0
    %v2212 = vpop.f32.mrb[0].mxu0
    %v2213 = vpop.f32.mrb[0].mxu0
    %2214 = vdwg.mxu0
    %2215 = vst [vmem:[#allocation2] sm:$0xff] %v2210
    // Predicated region
    $region30: #{mnist_net_forward.1} parent=1 // pred_check
      _
    $region31: #{mnist_net_forward.1} parent=1 // pred_check_branch
      %2217 = sbr.rel (0) target = $region33
    $region32: #{mnist_net_forward.1} parent=1 // pred_region
      %s2219 = ssub.s32 128, 128
      %2220 = vsyncadd [#allocation3], %s2219
      %s2222 = sshll.u32 [#allocation2], 4
      %s2223 = int_to_ptr.vmem [resolvable:$true] %s2222
      %2225 = dma.vmem_to_hbm [thread:$0]  %s2223, 128, %s7, [#allocation3]
    $region33: #{mnist_net_forward.1} parent=1 // pred_fallthru
      _
    // Predicated region
    $region34: #{mnist_net_forward.1} parent=1 // pred_check
      _
    $region35: #{mnist_net_forward.1} parent=1 // pred_check_branch
      %2227 = sbr.rel (0) target = $region37
    $region36: #{mnist_net_forward.1} parent=1 // pred_region
      %2228 = dma.done [#allocation3], 128
    $region37: #{mnist_net_forward.1} parent=1 // pred_fallthru
      _
    %2229 = vsyncpa [#allocation3], 1

</llo_original>
